<compile_context>
chip_gen: v7x
topology: tpu7x:2x2x1
jax: 0.10.0
libtpu: 0.0.40
codegen_flags: <defaults>
</compile_context>

<pallas_src>
import jax
import jax.numpy as jnp
from jax import lax
from jax.experimental import pallas as pl
from jax.experimental.pallas import tpu as pltpu

EPS = 1e-5  # nn.BatchNorm2d default eps


# ---------------------------------------------------------------------------------------------
# Pass 1: fused conv(3x3, pad=1, no bias) + per-channel sum / sum-of-squares (for batch-norm).
# ---------------------------------------------------------------------------------------------
def _conv_stats_kernel(xm_ref, xh_ref, w_ref, y_ref, s_ref, ss_ref):
    """One (batch, H-tile) grid step.

    xm_ref: (TH, W+2, Cin) bf16   main rows of the zero-padded NHWC input
    xh_ref: (2,  W+2, Cin) bf16   2-row bottom halo of the same padded array
    w_ref : (9*Cin, Cout)  bf16   HWIO conv weights flattened tap-major (VMEM-resident)
    y_ref : (TH, W, Cout)         raw (pre-BN) conv output tile
    s_ref : (1, Cout)      f32    per-tile per-channel sum of y
    ss_ref: (1, Cout)      f32    per-tile per-channel sum of y*y
    """
    TH, Wp, Cin = xm_ref.shape
    W = Wp - 2
    Cout = w_ref.shape[1]

    # Haloed (TH+2, W+2, Cin) input tile lives entirely in VMEM/vregs.
    xfull = jnp.concatenate([xm_ref[...], xh_ref[...]], axis=0)
    wfull = w_ref[...]

    # 3x3 conv as 9 shifted matmuls accumulated in f32 (bf16 operands on the MXU).
    acc = jnp.zeros((TH * W, Cout), jnp.float32)
    for kw in range(3):
        # Take the kw-shifted W window once, collapse (rows, W) -> rows*W so each kh tap below
        # is a plain 2-D matmul with a sublane-aligned row slice (layout-trivial for W % 8 == 0).
        xw = xfull[:, kw:kw + W, :].reshape((TH + 2) * W, Cin)
        for kh in range(3):
            tap = kh * 3 + kw
            xs = xw[kh * W:(kh + TH) * W, :]
            wk = wfull[tap * Cin:(tap + 1) * Cin, :]
            acc = acc + jnp.dot(xs, wk, preferred_element_type=jnp.float32)

    y_ref[...] = acc.reshape(TH, W, Cout).astype(y_ref.dtype)
    # Partial batch statistics for this tile; combined (tiny reduction) outside the kernel.
    s_ref[...] = jnp.sum(acc, axis=0, keepdims=True)
    ss_ref[...] = jnp.sum(acc * acc, axis=0, keepdims=True)


def _pick_tile_h(H, W, Cin, Cout, budget_bytes=4 << 20):
    """Largest even divisor of H whose per-tile working set fits a conservative VMEM budget
    (safe for v7x's smaller VMEM; v5e/v6e simply get the same comfortable tile)."""
    per_row = (2 * (W + 2) * Cin * 2      # double-buffered bf16 input rows
               + W * 9 * Cin * 2          # shifted bf16 matmul operands
               + W * Cout * 4             # f32 accumulator
               + 2 * W * Cout * 4)        # double-buffered output tile
    cap = max(2, budget_bytes // max(per_row, 1))
    best = None
    for th in range(2, H + 1, 2):
        if H % th == 0 and th <= cap:
            best = th
    return best if best is not None else H


def _conv_bn_stats(xp, w2d, out_dtype, tile_h=None):
    """xp: (N, H+2, W+2, Cin) zero-padded bf16 NHWC; w2d: (9*Cin, Cout) bf16.
    Returns (raw conv output (N,H,W,Cout), per-tile channel sums, per-tile channel sumsq)."""
    N, Hp, Wp, Cin = xp.shape
    H, W = Hp - 2, Wp - 2
    Cout = w2d.shape[1]
    TH = tile_h if tile_h is not None else _pick_tile_h(H, W, Cin, Cout)
    assert H % TH == 0 and TH % 2 == 0, (H, TH)
    n_h = H // TH

    return pl.pallas_call(
        _conv_stats_kernel,
        out_shape=(
            jax.ShapeDtypeStruct((N, H, W, Cout), out_dtype),
            jax.ShapeDtypeStruct((N, n_h, 1, Cout), jnp.float32),
            jax.ShapeDtypeStruct((N, n_h, 1, Cout), jnp.float32),
        ),
        grid_spec=pltpu.PrefetchScalarGridSpec(
            num_scalar_prefetch=0,
            grid=(N, n_h),
            in_specs=[
                # main TH rows of the padded input (streamed, double-buffered)
                pl.BlockSpec((None, TH, Wp, Cin), lambda n, h: (n, h, 0, 0)),
                # 2-row bottom halo: element offset (h+1)*TH expressed in 2-row blocks
                pl.BlockSpec((None, 2, Wp, Cin),
                             lambda n, h: (n, (h + 1) * (TH // 2), 0, 0)),
                # conv weights: constant block index -> fetched once, stays VMEM-resident
                pl.BlockSpec((9 * Cin, Cout), lambda n, h: (0, 0)),
            ],
            out_specs=[
                pl.BlockSpec((None, TH, W, Cout), lambda n, h: (n, h, 0, 0)),
                pl.BlockSpec((None, None, 1, Cout), lambda n, h: (n, h, 0, 0)),
                pl.BlockSpec((None, None, 1, Cout), lambda n, h: (n, h, 0, 0)),
            ],
        ),
        compiler_params=pltpu.CompilerParams(
            dimension_semantics=("parallel", "parallel")),
    )(xp, xp, w2d)


def _fold_bn(s, ss, count, gamma, beta):
    """Fold batch mean / biased variance (train-mode BatchNorm2d) and the BN affine into
    per-channel (scale, shift), all in f32."""
    s = jnp.sum(s, axis=(0, 1, 2))
    ss = jnp.sum(ss, axis=(0, 1, 2))
    mean = s / count
    var = ss / count - mean * mean
    scale = gamma * lax.rsqrt(var + EPS)
    shift = beta - mean * scale
    return scale, shift


# ---------------------------------------------------------------------------------------------
# Pass 2 (final stage): lane-dense BN-apply + ReLU.
# ---------------------------------------------------------------------------------------------
def _bn_relu_kernel(y_ref, sc_ref, sh_ref, o_ref):
    y = y_ref[...].astype(jnp.float32)
    o_ref[...] = jnp.maximum(y * sc_ref[...] + sh_ref[...], 0.0).astype(o_ref.dtype)


def _largest_tile(n, cap, multiple=8):
    cap = min(cap, n)
    cap -= cap % multiple
    for t in range(cap, 0, -multiple):
        if n % t == 0:
            return t
    return n


def _bn_relu_apply(y_nhwc, scale, shift, target_rows=512):
    """relu(y*scale + shift), presented to the kernel as a lane-dense (N*H, W*C) slab so the
    output stores are full-lane (unmasked) writes even for small channel counts."""
    N, H, W, C = y_nhwc.shape
    M, L = N * H, W * C
    y2d = y_nhwc.reshape(M, L)
    sc = jnp.tile(scale, W).reshape(1, L)
    sh = jnp.tile(shift, W).reshape(1, L)
    tm = _largest_tile(M, target_rows)
    out = pl.pallas_call(
        _bn_relu_kernel,
        out_shape=jax.ShapeDtypeStruct((M, L), jnp.float32),
        grid_spec=pltpu.PrefetchScalarGridSpec(
            num_scalar_prefetch=0,
            grid=(M // tm,),
            in_specs=[
                pl.BlockSpec((tm, L), lambda i: (i, 0)),
                pl.BlockSpec((1, L), lambda i: (0, 0)),
                pl.BlockSpec((1, L), lambda i: (0, 0)),
            ],
            out_specs=pl.BlockSpec((tm, L), lambda i: (i, 0)),
        ),
        compiler_params=pltpu.CompilerParams(dimension_semantics=("parallel",)),
    )(y2d, sc, sh)
    return out.reshape(N, H, W, C)


# ---------------------------------------------------------------------------------------------
# DoubleConv forward
# ---------------------------------------------------------------------------------------------
def double_conv(x_nchw, w1, g1, b1, w2, g2, b2, tile_h=None):
    """Forward pass of DoubleConv. x_nchw: (N, Cin, H, W); w*: (3,3,Cin,Cout) HWIO;
    g*/b*: BatchNorm affine. Uses training-mode batch statistics (fresh nn.BatchNorm2d)."""
    N, Cin, H, W = x_nchw.shape
    Cmid = w1.shape[-1]
    Cout = w2.shape[-1]
    assert H % 2 == 0, "even H required"  # TODO(synk): halo tiling for odd spatial height
    count = N * H * W

    x = jnp.transpose(x_nchw, (0, 2, 3, 1))                               # NCHW -> NHWC
    xp = jnp.pad(x.astype(jnp.bfloat16), ((0, 0), (1, 1), (1, 1), (0, 0)))

    # ---- stage 1: conv + batch stats ----
    y1_raw, s1, ss1 = _conv_bn_stats(
        xp, w1.reshape(9 * Cin, Cmid).astype(jnp.bfloat16),
        out_dtype=jnp.bfloat16, tile_h=tile_h)
    scale1, shift1 = _fold_bn(s1, ss1, count, g1, b1)

    # ---- BN1-apply + ReLU fused with the zero-padding of the stage-2 conv input:
    #      one trivially-fused XLA elementwise+pad pass over the bf16 intermediate
    #      (activation stays plain NHWC in HBM; no im2col round trip). ----
    a1 = jnp.maximum(y1_raw.astype(jnp.float32) * scale1 + shift1, 0.0)
    a1p = jnp.pad(a1.astype(jnp.bfloat16), ((0, 0), (1, 1), (1, 1), (0, 0)))

    # ---- stage 2: conv + batch stats ----
    y2_raw, s2, ss2 = _conv_bn_stats(
        a1p, w2.reshape(9 * Cmid, Cout).astype(jnp.bfloat16),
        out_dtype=jnp.float32, tile_h=tile_h)
    scale2, shift2 = _fold_bn(s2, ss2, count, g2, b2)

    # ---- BN2-apply + ReLU (lane-dense Pallas pass) ----
    y2 = _bn_relu_apply(y2_raw, scale2, shift2)
    return jnp.transpose(y2, (0, 3, 1, 2))                                # NHWC -> NCHW


# ---------------- pure-JAX reference with matching precision (correctness check) ----------------
def ref_double_conv(x_nchw, w1, g1, b1, w2, g2, b2):
    x = jnp.transpose(x_nchw, (0, 2, 3, 1))
    N, H, W, _ = x.shape
    count = N * H * W

    def conv(a, w):
        return lax.conv_general_dilated(
            a.astype(jnp.bfloat16), w.astype(jnp.bfloat16), (1, 1), "SAME",
            dimension_numbers=("NHWC", "HWIO", "NHWC"),
            preferred_element_type=jnp.float32)

    def fold(y, gamma, beta):
        mean = jnp.sum(y, axis=(0, 1, 2)) / count
        var = jnp.sum(y * y, axis=(0, 1, 2)) / count - mean * mean
        scale = gamma * lax.rsqrt(var + EPS)
        return scale, beta - mean * scale

    y1 = conv(x, w1)
    sc1, sh1 = fold(y1, g1, b1)
    a1 = jnp.maximum(y1.astype(jnp.bfloat16).astype(jnp.float32) * sc1 + sh1, 0.0)
    y2 = conv(a1, w2)
    sc2, sh2 = fold(y2, g2, b2)
    out = jnp.maximum(y2 * sc2 + sh2, 0.0)
    return jnp.transpose(out, (0, 3, 1, 2))


if __name__ == "__main__":
    key = jax.random.PRNGKey(0)
    k_x, k_w1, k_w2 = jax.random.split(key, 3)

    N, Cin, H, W = 2, 4, 16, 16
    Cmid, Cout = 8, 8  # mid_channels defaults to out_channels

    x = jax.random.normal(k_x, (N, Cin, H, W), dtype=jnp.float32)
    w1 = 0.1 * jax.random.normal(k_w1, (3, 3, Cin, Cmid), dtype=jnp.float32)   # HWIO
    w2 = 0.1 * jax.random.normal(k_w2, (3, 3, Cmid, Cout), dtype=jnp.float32)  # HWIO
    g1 = jnp.ones((Cmid,), jnp.float32)
    b1 = jnp.zeros((Cmid,), jnp.float32)
    g2 = jnp.ones((Cout,), jnp.float32)
    b2 = jnp.zeros((Cout,), jnp.float32)

    # tile_h=8 -> 2 H-tiles per image: exercises the halo stitching on the small test shape.
    out = jax.block_until_ready(double_conv(x, w1, g1, b1, w2, g2, b2, tile_h=8))
    ref = jax.block_until_ready(ref_double_conv(x, w1, g1, b1, w2, g2, b2))

    assert out.shape == (N, Cout, H, W)
    err = float(jnp.max(jnp.abs(out - ref)))
    assert err < 2e-2, f"mismatch vs reference: max abs err = {err}"
    print("KERNEL_OK")
</pallas_src>

<mosaic_0001>
module attributes {stable_mosaic.version = 11 : i64} {
  func.func @_conv_stats_kernel(%arg0: i32, %arg1: i32, %arg2: memref<1x8x18x4xbf16, #tpu.memory_space<vmem>>, %arg3: memref<1x2x18x4xbf16, #tpu.memory_space<vmem>>, %arg4: memref<36x8xbf16, #tpu.memory_space<vmem>>, %arg5: memref<1x8x16x8xbf16, #tpu.memory_space<vmem>>, %arg6: memref<1x1x1x8xf32, #tpu.memory_space<vmem>>, %arg7: memref<1x1x1x8xf32, #tpu.memory_space<vmem>>) attributes {dimension_semantics = [#tpu.dimension_semantics<parallel>, #tpu.dimension_semantics<parallel>], iteration_bounds = array<i64: 2, 2>, scalar_prefetch = 0 : i64, scratch_operands = 0 : i64, tpu.core_type = #tpu.core_type<tc>, window_params = [{transform_indices = @transform_0, window_bounds = array<i64: 1, 8, 18, 4>}, {transform_indices = @transform_1, window_bounds = array<i64: 1, 2, 18, 4>}, {pipeline_mode = #tpu.pipeline_mode<synchronous>, transform_indices = @transform_2, window_bounds = array<i64: 36, 8>}, {transform_indices = @transform_3, window_bounds = array<i64: 1, 8, 16, 8>}, {transform_indices = @transform_4, window_bounds = array<i64: 1, 1, 1, 8>}, {transform_indices = @transform_5, window_bounds = array<i64: 1, 1, 1, 8>}]} {
    %c0 = arith.constant 0 : index
    %c0_0 = arith.constant 0 : index
    %c0_1 = arith.constant 0 : index
    %c0_2 = arith.constant 0 : index
    %0 = vector.load %arg2[%c0, %c0_0, %c0_1, %c0_2] : memref<1x8x18x4xbf16, #tpu.memory_space<vmem>>, vector<1x8x18x4xbf16>
    %1 = vector.shape_cast %0 : vector<1x8x18x4xbf16> to vector<8x18x4xbf16>
    %c0_3 = arith.constant 0 : index
    %c0_4 = arith.constant 0 : index
    %c0_5 = arith.constant 0 : index
    %c0_6 = arith.constant 0 : index
    %2 = vector.load %arg3[%c0_3, %c0_4, %c0_5, %c0_6] : memref<1x2x18x4xbf16, #tpu.memory_space<vmem>>, vector<1x2x18x4xbf16>
    %3 = vector.shape_cast %2 : vector<1x2x18x4xbf16> to vector<2x18x4xbf16>
    %4 = tpu.concatenate %1, %3 in 0 : vector<8x18x4xbf16>, vector<2x18x4xbf16> -> vector<10x18x4xbf16>
    %c0_7 = arith.constant 0 : index
    %c0_8 = arith.constant 0 : index
    %5 = vector.load %arg4[%c0_7, %c0_8] : memref<36x8xbf16, #tpu.memory_space<vmem>>, vector<36x8xbf16>
    %cst = arith.constant 0.000000e+00 : f32
    %6 = vector.broadcast %cst : f32 to vector<128x8xf32>
    %7 = vector.extract_strided_slice %4 {offsets = [0, 0, 0], sizes = [10, 16, 4], strides = [1, 1, 1]} : vector<10x18x4xbf16> to vector<10x16x4xbf16>
    %8 = vector.shape_cast %7 : vector<10x16x4xbf16> to vector<160x4xbf16>
    %9 = vector.extract_strided_slice %8 {offsets = [0, 0], sizes = [128, 4], strides = [1, 1]} : vector<160x4xbf16> to vector<128x4xbf16>
    %10 = vector.extract_strided_slice %5 {offsets = [0, 0], sizes = [4, 8], strides = [1, 1]} : vector<36x8xbf16> to vector<4x8xbf16>
    %cst_9 = arith.constant dense<0.000000e+00> : vector<128x8xf32>
    %11 = tpu.matmul %9, %10, %cst_9 {dimension_numbers = #tpu.dot_dimension_numbers<[1], [0], [0], [1], [0, 0, 1, 1], [], []>} : vector<128x4xbf16>, vector<4x8xbf16>, vector<128x8xf32> -> vector<128x8xf32>
    %12 = arith.addf %6, %11 : vector<128x8xf32>
    %13 = vector.extract_strided_slice %8 {offsets = [16, 0], sizes = [128, 4], strides = [1, 1]} : vector<160x4xbf16> to vector<128x4xbf16>
    %14 = vector.extract_strided_slice %5 {offsets = [12, 0], sizes = [4, 8], strides = [1, 1]} : vector<36x8xbf16> to vector<4x8xbf16>
    %cst_10 = arith.constant dense<0.000000e+00> : vector<128x8xf32>
    %15 = tpu.matmul %13, %14, %cst_10 {dimension_numbers = #tpu.dot_dimension_numbers<[1], [0], [0], [1], [0, 0, 1, 1], [], []>} : vector<128x4xbf16>, vector<4x8xbf16>, vector<128x8xf32> -> vector<128x8xf32>
    %16 = arith.addf %12, %15 : vector<128x8xf32>
    %17 = vector.extract_strided_slice %8 {offsets = [32, 0], sizes = [128, 4], strides = [1, 1]} : vector<160x4xbf16> to vector<128x4xbf16>
    %18 = vector.extract_strided_slice %5 {offsets = [24, 0], sizes = [4, 8], strides = [1, 1]} : vector<36x8xbf16> to vector<4x8xbf16>
    %cst_11 = arith.constant dense<0.000000e+00> : vector<128x8xf32>
    %19 = tpu.matmul %17, %18, %cst_11 {dimension_numbers = #tpu.dot_dimension_numbers<[1], [0], [0], [1], [0, 0, 1, 1], [], []>} : vector<128x4xbf16>, vector<4x8xbf16>, vector<128x8xf32> -> vector<128x8xf32>
    %20 = arith.addf %16, %19 : vector<128x8xf32>
    %21 = vector.extract_strided_slice %4 {offsets = [0, 1, 0], sizes = [10, 16, 4], strides = [1, 1, 1]} : vector<10x18x4xbf16> to vector<10x16x4xbf16>
    %22 = vector.shape_cast %21 : vector<10x16x4xbf16> to vector<160x4xbf16>
    %23 = vector.extract_strided_slice %22 {offsets = [0, 0], sizes = [128, 4], strides = [1, 1]} : vector<160x4xbf16> to vector<128x4xbf16>
    %24 = vector.extract_strided_slice %5 {offsets = [4, 0], sizes = [4, 8], strides = [1, 1]} : vector<36x8xbf16> to vector<4x8xbf16>
    %cst_12 = arith.constant dense<0.000000e+00> : vector<128x8xf32>
    %25 = tpu.matmul %23, %24, %cst_12 {dimension_numbers = #tpu.dot_dimension_numbers<[1], [0], [0], [1], [0, 0, 1, 1], [], []>} : vector<128x4xbf16>, vector<4x8xbf16>, vector<128x8xf32> -> vector<128x8xf32>
    %26 = arith.addf %20, %25 : vector<128x8xf32>
    %27 = vector.extract_strided_slice %22 {offsets = [16, 0], sizes = [128, 4], strides = [1, 1]} : vector<160x4xbf16> to vector<128x4xbf16>
    %28 = vector.extract_strided_slice %5 {offsets = [16, 0], sizes = [4, 8], strides = [1, 1]} : vector<36x8xbf16> to vector<4x8xbf16>
    %cst_13 = arith.constant dense<0.000000e+00> : vector<128x8xf32>
    %29 = tpu.matmul %27, %28, %cst_13 {dimension_numbers = #tpu.dot_dimension_numbers<[1], [0], [0], [1], [0, 0, 1, 1], [], []>} : vector<128x4xbf16>, vector<4x8xbf16>, vector<128x8xf32> -> vector<128x8xf32>
    %30 = arith.addf %26, %29 : vector<128x8xf32>
    %31 = vector.extract_strided_slice %22 {offsets = [32, 0], sizes = [128, 4], strides = [1, 1]} : vector<160x4xbf16> to vector<128x4xbf16>
    %32 = vector.extract_strided_slice %5 {offsets = [28, 0], sizes = [4, 8], strides = [1, 1]} : vector<36x8xbf16> to vector<4x8xbf16>
    %cst_14 = arith.constant dense<0.000000e+00> : vector<128x8xf32>
    %33 = tpu.matmul %31, %32, %cst_14 {dimension_numbers = #tpu.dot_dimension_numbers<[1], [0], [0], [1], [0, 0, 1, 1], [], []>} : vector<128x4xbf16>, vector<4x8xbf16>, vector<128x8xf32> -> vector<128x8xf32>
    %34 = arith.addf %30, %33 : vector<128x8xf32>
    %35 = vector.extract_strided_slice %4 {offsets = [0, 2, 0], sizes = [10, 16, 4], strides = [1, 1, 1]} : vector<10x18x4xbf16> to vector<10x16x4xbf16>
    %36 = vector.shape_cast %35 : vector<10x16x4xbf16> to vector<160x4xbf16>
    %37 = vector.extract_strided_slice %36 {offsets = [0, 0], sizes = [128, 4], strides = [1, 1]} : vector<160x4xbf16> to vector<128x4xbf16>
    %38 = vector.extract_strided_slice %5 {offsets = [8, 0], sizes = [4, 8], strides = [1, 1]} : vector<36x8xbf16> to vector<4x8xbf16>
    %cst_15 = arith.constant dense<0.000000e+00> : vector<128x8xf32>
    %39 = tpu.matmul %37, %38, %cst_15 {dimension_numbers = #tpu.dot_dimension_numbers<[1], [0], [0], [1], [0, 0, 1, 1], [], []>} : vector<128x4xbf16>, vector<4x8xbf16>, vector<128x8xf32> -> vector<128x8xf32>
    %40 = arith.addf %34, %39 : vector<128x8xf32>
    %41 = vector.extract_strided_slice %36 {offsets = [16, 0], sizes = [128, 4], strides = [1, 1]} : vector<160x4xbf16> to vector<128x4xbf16>
    %42 = vector.extract_strided_slice %5 {offsets = [20, 0], sizes = [4, 8], strides = [1, 1]} : vector<36x8xbf16> to vector<4x8xbf16>
    %cst_16 = arith.constant dense<0.000000e+00> : vector<128x8xf32>
    %43 = tpu.matmul %41, %42, %cst_16 {dimension_numbers = #tpu.dot_dimension_numbers<[1], [0], [0], [1], [0, 0, 1, 1], [], []>} : vector<128x4xbf16>, vector<4x8xbf16>, vector<128x8xf32> -> vector<128x8xf32>
    %44 = arith.addf %40, %43 : vector<128x8xf32>
    %45 = vector.extract_strided_slice %36 {offsets = [32, 0], sizes = [128, 4], strides = [1, 1]} : vector<160x4xbf16> to vector<128x4xbf16>
    %46 = vector.extract_strided_slice %5 {offsets = [32, 0], sizes = [4, 8], strides = [1, 1]} : vector<36x8xbf16> to vector<4x8xbf16>
    %cst_17 = arith.constant dense<0.000000e+00> : vector<128x8xf32>
    %47 = tpu.matmul %45, %46, %cst_17 {dimension_numbers = #tpu.dot_dimension_numbers<[1], [0], [0], [1], [0, 0, 1, 1], [], []>} : vector<128x4xbf16>, vector<4x8xbf16>, vector<128x8xf32> -> vector<128x8xf32>
    %48 = arith.addf %44, %47 : vector<128x8xf32>
    %49 = vector.shape_cast %48 : vector<128x8xf32> to vector<8x16x8xf32>
    %50 = arith.truncf %49 : vector<8x16x8xf32> to vector<8x16x8xbf16>
    %c0_18 = arith.constant 0 : index
    %c0_19 = arith.constant 0 : index
    %c0_20 = arith.constant 0 : index
    %c0_21 = arith.constant 0 : index
    %51 = vector.load %arg5[%c0_18, %c0_19, %c0_20, %c0_21] : memref<1x8x16x8xbf16, #tpu.memory_space<vmem>>, vector<1x8x16x8xbf16>
    %52 = vector.shape_cast %51 : vector<1x8x16x8xbf16> to vector<8x16x8xbf16>
    %53 = vector.shape_cast %50 : vector<8x16x8xbf16> to vector<1x8x16x8xbf16>
    tpu.vector_store %arg5[%c0_18, %c0_19, %c0_20, %c0_21], %53 {strides = array<i32>} : memref<1x8x16x8xbf16, #tpu.memory_space<vmem>>, vector<1x8x16x8xbf16>,
    %cst_22 = arith.constant dense<0.000000e+00> : vector<8xf32>
    %54 = vector.multi_reduction <add>, %48, %cst_22 [0] : vector<128x8xf32> to vector<8xf32>
    %55 = vector.shape_cast %54 : vector<8xf32> to vector<1x8xf32>
    %c0_23 = arith.constant 0 : index
    %c0_24 = arith.constant 0 : index
    %c0_25 = arith.constant 0 : index
    %c0_26 = arith.constant 0 : index
    %56 = vector.load %arg6[%c0_23, %c0_24, %c0_25, %c0_26] : memref<1x1x1x8xf32, #tpu.memory_space<vmem>>, vector<1x1x1x8xf32>
    %57 = vector.shape_cast %56 : vector<1x1x1x8xf32> to vector<1x8xf32>
    %58 = vector.shape_cast %55 : vector<1x8xf32> to vector<1x1x1x8xf32>
    tpu.vector_store %arg6[%c0_23, %c0_24, %c0_25, %c0_26], %58 {strides = array<i32>} : memref<1x1x1x8xf32, #tpu.memory_space<vmem>>, vector<1x1x1x8xf32>,
    %59 = arith.mulf %48, %48 : vector<128x8xf32>
    %cst_27 = arith.constant dense<0.000000e+00> : vector<8xf32>
    %60 = vector.multi_reduction <add>, %59, %cst_27 [0] : vector<128x8xf32> to vector<8xf32>
    %61 = vector.shape_cast %60 : vector<8xf32> to vector<1x8xf32>
    %c0_28 = arith.constant 0 : index
    %c0_29 = arith.constant 0 : index
    %c0_30 = arith.constant 0 : index
    %c0_31 = arith.constant 0 : index
    %62 = vector.load %arg7[%c0_28, %c0_29, %c0_30, %c0_31] : memref<1x1x1x8xf32, #tpu.memory_space<vmem>>, vector<1x1x1x8xf32>
    %63 = vector.shape_cast %62 : vector<1x1x1x8xf32> to vector<1x8xf32>
    %64 = vector.shape_cast %61 : vector<1x8xf32> to vector<1x1x1x8xf32>
    tpu.vector_store %arg7[%c0_28, %c0_29, %c0_30, %c0_31], %64 {strides = array<i32>} : memref<1x1x1x8xf32, #tpu.memory_space<vmem>>, vector<1x1x1x8xf32>,
    return
  }
  func.func @transform_0(%arg0: i32, %arg1: i32) -> (i32, i32, i32, i32) {
    %c0_i32 = arith.constant 0 : i32
    %c0_i32_0 = arith.constant 0 : i32
    %c0_i32_1 = arith.constant 0 : i32
    return %arg0, %arg1, %c0_i32, %c0_i32_0 : i32, i32, i32, i32
  }
  func.func @transform_1(%arg0: i32, %arg1: i32) -> (i32, i32, i32, i32) {
    %c1_i32 = arith.constant 1 : i32
    %0 = arith.addi %arg1, %c1_i32 : i32
    %c4_i32 = arith.constant 4 : i32
    %1 = arith.muli %0, %c4_i32 : i32
    %c0_i32 = arith.constant 0 : i32
    %c0_i32_0 = arith.constant 0 : i32
    %c0_i32_1 = arith.constant 0 : i32
    return %arg0, %1, %c0_i32, %c0_i32_0 : i32, i32, i32, i32
  }
  func.func @transform_2(%arg0: i32, %arg1: i32) -> (i32, i32) {
    %c0_i32 = arith.constant 0 : i32
    %c0_i32_0 = arith.constant 0 : i32
    %c0_i32_1 = arith.constant 0 : i32
    return %c0_i32, %c0_i32_0 : i32, i32
  }
  func.func @transform_3(%arg0: i32, %arg1: i32) -> (i32, i32, i32, i32) {
    %c0_i32 = arith.constant 0 : i32
    %c0_i32_0 = arith.constant 0 : i32
    %c0_i32_1 = arith.constant 0 : i32
    return %arg0, %arg1, %c0_i32, %c0_i32_0 : i32, i32, i32, i32
  }
  func.func @transform_4(%arg0: i32, %arg1: i32) -> (i32, i32, i32, i32) {
    %c0_i32 = arith.constant 0 : i32
    %c0_i32_0 = arith.constant 0 : i32
    %c0_i32_1 = arith.constant 0 : i32
    return %arg0, %arg1, %c0_i32, %c0_i32_0 : i32, i32, i32, i32
  }
  func.func @transform_5(%arg0: i32, %arg1: i32) -> (i32, i32, i32, i32) {
    %c0_i32 = arith.constant 0 : i32
    %c0_i32_0 = arith.constant 0 : i32
    %c0_i32_1 = arith.constant 0 : i32
    return %arg0, %arg1, %c0_i32, %c0_i32_0 : i32, i32, i32, i32
  }
}

</mosaic_0001>

<llo_original>
// kernel: tpu_custom_call.1
$region0: #{tpu_custom_call.1}
  #allocation0 [shape = 'u32[]', space=smem, size = 0x4, offset = 0x4, fixed_abs, tag = 'smem constant byte address 0x4 - core index']
  #allocation1 [shape = 'u32[144,128]{1,0:T(1,128)}', space=vmem, size = 0x12000, scoped, tag = 'internal scratch']
  %s0 = inlined_call_operand.vmem [shape: bf16[2,18,18,4], index: 0, kind: input, shape index: {}]
  %s1 = inlined_call_operand.vmem [shape: bf16[2,18,18,4], index: 1, kind: input, shape index: {}]
  %s2 = inlined_call_operand.vmem [shape: bf16[36,8], index: 2, kind: input, shape index: {}]
  %s3 = inlined_call_operand.vmem [shape: bf16[2,16,16,8], index: 3, kind: output, shape index: {0}]
  %s4 = inlined_call_operand.hbm [shape: f32[2,2,1,8], index: 4, kind: output, shape index: {1}]
  %s5 = inlined_call_operand.hbm [shape: f32[2,2,1,8], index: 5, kind: output, shape index: {2}]
  %6 = xla_tuple %s3, %s4, %s5
  %s7 = sld [smem:[#allocation0]]
  $region61: #{tpu_custom_call.1} parent=0
    _
  %s9 = ssub.s32 1, %s7
  %s10 = scalar_select 0, %s9, %s7
  $region1: #{tpu_custom_call.1} parent=0
    #allocation2 [shape = 'u8[1024]{0}', space=vmem, size = 0x400, scoped, tag = 'output window, operand 1']
    #allocation3 [shape = 's32[2]{0}', space=sflag, size = 0x8, scoped, tag = 'scoped memory for tpu_custom_call.1']
    #allocation4 [shape = 'u8[1024]{0}', space=vmem, size = 0x400, scoped, tag = 'output window, operand 2']
    #allocation5 [shape = 's32[2]{0}', space=sflag, size = 0x8, scoped, tag = 'scoped memory for tpu_custom_call.1']
    %11 = vsyncpa [#allocation3], 0
    %s12 = scalar_lea.sflag [#allocation3], 1
    %13 = vsyncpa %s12, 0
    %14 = vsyncpa [#allocation5], 0
    %s15 = scalar_lea.sflag [#allocation5], 1
    %16 = vsyncpa %s15, 0
    loop: start=0, step=1, limit=6
    $region2: #{tpu_custom_call.1} parent=1 // loop_pre_header
      _
    $region3: #{tpu_custom_call.1} parent=1 // loop_header
      %s18 = sphi 0, %s22
      %p19 = scmp.ge.s32.totalorder %s18, 6
      %s25 = sphi 0, %s37
      %s26 = sphi 0, %s33
      %s27 = sphi 0, %s25
      %s28 = sphi 0, %s26
      %s29 = sphi 0, %s27
      %s30 = sphi 0, %s28
      %s42 = sphi 0, %s44
      %s45 = sphi 0, %s42
      %s46 = sphi 0, %s45
      %s62 = sphi 0, %s46
      %s74 = sphi 0, %s76
      %s77 = sphi 0, %s74
      %s78 = sphi 0, %s77
      %s94 = sphi 0, %s78
      %s98 = sphi 0, %s98
      %s100 = sphi 0, %s98
      %s101 = sphi 0, %s100
      %s115 = sphi 0, %s101
      %s123 = sphi 0, %s125
      %s126 = sphi 0, %s123
      %s127 = sphi 0, %s126
      %s143 = sphi 0, %s127
      %s151 = sphi 0, %s153
      %s154 = sphi 0, %s151
      %s155 = sphi 0, %s154
      %s171 = sphi 0, %s155
      %s179 = sphi 0, %s181
      %s182 = sphi 0, %s179
      %s183 = sphi 0, %s182
      %s199 = sphi 0, %s183
    $region4: #{tpu_custom_call.1} parent=1 // loop_header_branch
      %21 = sbr.rel (%p19) target = $region8
    $region5: #{tpu_custom_call.1} parent=1 // loop_body
      %s23 = ssub.s32 %s18, 1
      %s24 = ssub.s32 %s18, 2
      %s31 = sadd.s32 1, %s26
      %p32 = scmp.ge.s32.totalorder %s31, 2
      %s33 = scalar_select %p32, 0, %s31
      %s34 = sadd.s32 1, %s25
      %s35 = scalar_select %p32, %s34, %s25
      %p36 = scmp.ge.s32.totalorder %s35, 2
      %s37 = scalar_select %p36, 0, %s35
      %s38 = ssub.s32 %s25, %s37
      %s39 = ssub.s32 %s26, %s33
      %s40 = sor.u32 %s38, %s39
      %p41 = scmp.eq.s32.totalorder %s40, 0
      %s43 = sadd.s32 %s42, 1
      %s44 = scalar_select %p41, %s42, %s43
      %p47 = pneg %p41
      %p48 = scmp.eq.s32.totalorder %s18, 3
      %p49 = por %p47, %p48
      %p50 = scmp.ne.s32.totalorder %s42, %s45
      %p51 = scmp.eq.s32.totalorder %s18, 0
      %p52 = por %p50, %p51
      %p53 = scmp.ne.s32.totalorder %s42, %s45
      %p54 = scmp.eq.s32.totalorder %s23, 3
      %p55 = por %p53, %p54
      %p56 = scmp.ne.s32.totalorder %s45, %s46
      %p57 = scmp.eq.s32.totalorder %s23, 0
      %p58 = por %p56, %p57
      %p59 = scmp.ne.s32.totalorder %s45, %s46
      %p60 = scmp.eq.s32.totalorder %s24, 3
      %p61 = por %p59, %p60
      %p63 = scmp.ne.s32.totalorder %s46, %s62
      %p64 = scmp.eq.s32.totalorder %s24, 0
      %p65 = por %p63, %p64
      %s66 = sadd.s32 %s26, 1
      %s67 = smul.u32 %s66, 4
      %s68 = sadd.s32 %s33, 1
      %s69 = smul.u32 %s68, 4
      %s70 = ssub.s32 %s25, %s37
      %s71 = ssub.s32 %s67, %s69
      %s72 = sor.u32 %s70, %s71
      %p73 = scmp.eq.s32.totalorder %s72, 0
      %s75 = sadd.s32 %s74, 1
      %s76 = scalar_select %p73, %s74, %s75
      %p79 = pneg %p73
      %p80 = scmp.eq.s32.totalorder %s18, 3
      %p81 = por %p79, %p80
      %p82 = scmp.ne.s32.totalorder %s74, %s77
      %p83 = scmp.eq.s32.totalorder %s18, 0
      %p84 = por %p82, %p83
      %p85 = scmp.ne.s32.totalorder %s74, %s77
      %p86 = scmp.eq.s32.totalorder %s23, 3
      %p87 = por %p85, %p86
      %p88 = scmp.ne.s32.totalorder %s77, %s78
      %p89 = scmp.eq.s32.totalorder %s23, 0
      %p90 = por %p88, %p89
      %p91 = scmp.ne.s32.totalorder %s77, %s78
      %p92 = scmp.eq.s32.totalorder %s24, 3
      %p93 = por %p91, %p92
      %p95 = scmp.ne.s32.totalorder %s78, %s94
      %p96 = scmp.eq.s32.totalorder %s24, 0
      %p97 = por %p95, %p96
      %s99 = sadd.s32 %s98, 1
      %p102 = scmp.eq.s32.totalorder %s18, 3
      %p103 = scmp.ne.s32.totalorder %s98, %s100
      %p104 = scmp.eq.s32.totalorder %s18, 0
      %p105 = por %p103, %p104
      %p106 = scmp.ne.s32.totalorder %s98, %s100
      %p107 = scmp.eq.s32.totalorder %s23, 3
      %p108 = por %p106, %p107
      %p109 = scmp.ne.s32.totalorder %s100, %s101
      %p110 = scmp.eq.s32.totalorder %s23, 0
      %p111 = por %p109, %p110
      %p112 = scmp.ne.s32.totalorder %s100, %s101
      %p113 = scmp.eq.s32.totalorder %s24, 3
      %p114 = por %p112, %p113
      %p116 = scmp.ne.s32.totalorder %s101, %s115
      %p117 = scmp.eq.s32.totalorder %s24, 0
      %p118 = por %p116, %p117
      %s119 = ssub.s32 %s25, %s37
      %s120 = ssub.s32 %s26, %s33
      %s121 = sor.u32 %s119, %s120
      %p122 = scmp.eq.s32.totalorder %s121, 0
      %s124 = sadd.s32 %s123, 1
      %s125 = scalar_select %p122, %s123, %s124
      %p128 = pneg %p122
      %p129 = scmp.eq.s32.totalorder %s18, 3
      %p130 = por %p128, %p129
      %p131 = scmp.ne.s32.totalorder %s123, %s126
      %p132 = scmp.eq.s32.totalorder %s18, 0
      %p133 = por %p131, %p132
      %p134 = scmp.ne.s32.totalorder %s123, %s126
      %p135 = scmp.eq.s32.totalorder %s23, 3
      %p136 = por %p134, %p135
      %p137 = scmp.ne.s32.totalorder %s126, %s127
      %p138 = scmp.eq.s32.totalorder %s23, 0
      %p139 = por %p137, %p138
      %p140 = scmp.ne.s32.totalorder %s126, %s127
      %p141 = scmp.eq.s32.totalorder %s24, 3
      %p142 = por %p140, %p141
      %p144 = scmp.ne.s32.totalorder %s127, %s143
      %p145 = scmp.eq.s32.totalorder %s24, 0
      %p146 = por %p144, %p145
      %s147 = ssub.s32 %s25, %s37
      %s148 = ssub.s32 %s26, %s33
      %s149 = sor.u32 %s147, %s148
      %p150 = scmp.eq.s32.totalorder %s149, 0
      %s152 = sadd.s32 %s151, 1
      %s153 = scalar_select %p150, %s151, %s152
      %p156 = pneg %p150
      %p157 = scmp.eq.s32.totalorder %s18, 3
      %p158 = por %p156, %p157
      %p159 = scmp.ne.s32.totalorder %s151, %s154
      %p160 = scmp.eq.s32.totalorder %s18, 0
      %p161 = por %p159, %p160
      %p162 = scmp.ne.s32.totalorder %s151, %s154
      %p163 = scmp.eq.s32.totalorder %s23, 3
      %p164 = por %p162, %p163
      %p165 = scmp.ne.s32.totalorder %s154, %s155
      %p166 = scmp.eq.s32.totalorder %s23, 0
      %p167 = por %p165, %p166
      %p168 = scmp.ne.s32.totalorder %s154, %s155
      %p169 = scmp.eq.s32.totalorder %s24, 3
      %p170 = por %p168, %p169
      %p172 = scmp.ne.s32.totalorder %s155, %s171
      %p173 = scmp.eq.s32.totalorder %s24, 0
      %p174 = por %p172, %p173
      %s175 = ssub.s32 %s25, %s37
      %s176 = ssub.s32 %s26, %s33
      %s177 = sor.u32 %s175, %s176
      %p178 = scmp.eq.s32.totalorder %s177, 0
      %s180 = sadd.s32 %s179, 1
      %s181 = scalar_select %p178, %s179, %s180
      %p184 = pneg %p178
      %p185 = scmp.eq.s32.totalorder %s18, 3
      %p186 = por %p184, %p185
      %p187 = scmp.ne.s32.totalorder %s179, %s182
      %p188 = scmp.eq.s32.totalorder %s18, 0
      %p189 = por %p187, %p188
      %p190 = scmp.ne.s32.totalorder %s179, %s182
      %p191 = scmp.eq.s32.totalorder %s23, 3
      %p192 = por %p190, %p191
      %p193 = scmp.ne.s32.totalorder %s182, %s183
      %p194 = scmp.eq.s32.totalorder %s23, 0
      %p195 = por %p193, %p194
      %p196 = scmp.ne.s32.totalorder %s182, %s183
      %p197 = scmp.eq.s32.totalorder %s24, 3
      %p198 = por %p196, %p197
      %p200 = scmp.ne.s32.totalorder %s183, %s199
      %p201 = scmp.eq.s32.totalorder %s24, 0
      %p202 = por %p200, %p201
      %p203 = scmp.le.s32.totalorder 1, %s18
      %p204 = scmp.lt.s32.totalorder %s18, 5
      %p205 = pnand %p203, %p204
      %p206 = pneg %p205
      // Predicated region
      $region9: #{tpu_custom_call.1} parent=5 // pred_check
        _
      $region10: #{tpu_custom_call.1} parent=5 // pred_check_branch
        %208 = sbr.rel (%p205) target = $region12
      $region11: #{tpu_custom_call.1} parent=5 // pred_region
        %s209 = ssub.s32 %s18, 1
        // Predicated region
        $region13: #{tpu_custom_call.1} parent=11 // pred_check
          %p210 = pneg %p111
        $region14: #{tpu_custom_call.1} parent=11 // pred_check_branch
          %212 = sbr.rel (%p210) target = $region16
        $region15: #{tpu_custom_call.1} parent=11 // pred_region
          _
        $region16: #{tpu_custom_call.1} parent=11 // pred_fallthru
          _
      $region12: #{tpu_custom_call.1} parent=5 // pred_fallthru
        _
      %p213 = scmp.lt.s32.totalorder %s18, 4
      // Predicated region
      $region17: #{tpu_custom_call.1} parent=5 // pred_check
        %p214 = pneg %p213
      $region18: #{tpu_custom_call.1} parent=5 // pred_check_branch
        %216 = sbr.rel (%p214) target = $region20
      $region19: #{tpu_custom_call.1} parent=5 // pred_region
        // Predicated region
        $region21: #{tpu_custom_call.1} parent=19 // pred_check
          %p217 = pneg %p52
        $region22: #{tpu_custom_call.1} parent=19 // pred_check_branch
          %219 = sbr.rel (%p217) target = $region24
        $region23: #{tpu_custom_call.1} parent=19 // pred_region
          %s220 = smul.u32 8, %s26
          %s221 = ssub.s32 18, %s220
          %p222 = scmp.lt.s32.totalorder %s221, 8
          %s223 = scalar_select %p222, %s221, 8
          %s224 = smul.u32 64, %s223
          %s225 = smul.u32 %s224, 3
          %p226 = scmp.lt.s32.totalorder %s25, 1
          %s227 = scalar_select %p226, %s25, 1
          %p228 = scmp.lt.s32.totalorder %s220, 17
          %s229 = scalar_select %p228, %s220, 17
          %s230 = smul.addr %s229, 3
          %s231 = smul.addr %s227, 54
          %s232 = sadd.s32 %s230, %s231
          %s233 = smul.addr %s232, 4
          %s234 = scalar_lea.vmem %s0, %s233
          %s235 = smul.u32 8, %s26
          %s236 = ssub.s32 18, %s235
          %p237 = scmp.lt.s32.totalorder %s236, 8
          %s238 = scalar_select %p237, %s236, 8
          %s239 = smul.u32 64, %s238
          %s240 = smul.u32 %s239, 3
        $region24: #{tpu_custom_call.1} parent=19 // pred_fallthru
          _
        // Predicated region
        $region25: #{tpu_custom_call.1} parent=19 // pred_check
          %p241 = pneg %p84
        $region26: #{tpu_custom_call.1} parent=19 // pred_check_branch
          %243 = sbr.rel (%p241) target = $region28
        $region27: #{tpu_custom_call.1} parent=19 // pred_region
          %s244 = sadd.s32 %s26, 1
          %s245 = smul.u32 %s244, 4
          %s246 = smul.u32 2, %s245
          %p247 = scmp.lt.s32.totalorder %s25, 1
          %s248 = scalar_select %p247, %s25, 1
          %p249 = scmp.lt.s32.totalorder %s246, 17
          %s250 = scalar_select %p249, %s246, 17
          %s251 = smul.addr %s250, 3
          %s252 = smul.addr %s248, 54
          %s253 = sadd.s32 %s251, %s252
          %s254 = smul.addr %s253, 4
          %s255 = scalar_lea.vmem %s1, %s254
          %s256 = sadd.s32 %s26, 1
          %s257 = smul.u32 %s256, 4
          %s258 = smul.u32 2, %s257
        $region28: #{tpu_custom_call.1} parent=19 // pred_fallthru
          _
      $region20: #{tpu_custom_call.1} parent=5 // pred_fallthru
        _
      %p259 = scmp.le.s32.totalorder 1, %s18
      %p260 = scmp.lt.s32.totalorder %s18, 5
      %p261 = pnand %p259, %p260
      %p262 = pneg %p261
      // Predicated region
      $region29: #{tpu_custom_call.1} parent=5 // pred_check
        _
      $region30: #{tpu_custom_call.1} parent=5 // pred_check_branch
        %264 = sbr.rel (%p261) target = $region32
      $region31: #{tpu_custom_call.1} parent=5 // pred_region
        %s265 = ssub.s32 %s18, 1
        %s266 = smul.u32 8, %s28
        %s267 = ssub.s32 18, %s266
        %p268 = scmp.lt.s32.totalorder %s267, 8
        %s269 = scalar_select %p268, %s267, 8
        %s270 = smul.u32 64, %s269
        %s271 = smul.u32 %s270, 3
        %p272 = scmp.lt.s32.totalorder %s27, 1
        %s273 = scalar_select %p272, %s27, 1
        %p274 = scmp.lt.s32.totalorder %s266, 17
        %s275 = scalar_select %p274, %s266, 17
        %s276 = smul.addr %s275, 3
        %s277 = smul.addr %s273, 54
        %s278 = sadd.s32 %s276, %s277
        %s279 = smul.addr %s278, 4
        %s280 = scalar_lea.vmem %s0, %s279
        %p281 = pneg %p58
        %p282 = pneg %p55
        %s283 = sadd.s32 %s28, 1
        %s284 = smul.u32 %s283, 4
        %s285 = smul.u32 2, %s284
        %p286 = scmp.lt.s32.totalorder %s27, 1
        %s287 = scalar_select %p286, %s27, 1
        %p288 = scmp.lt.s32.totalorder %s285, 17
        %s289 = scalar_select %p288, %s285, 17
        %s290 = smul.addr %s289, 3
        %s291 = smul.addr %s287, 54
        %s292 = sadd.s32 %s290, %s291
        %s293 = smul.addr %s292, 4
        %s294 = scalar_lea.vmem %s1, %s293
        %p295 = pneg %p90
        %p296 = pneg %p87
        %p297 = pneg %p111
        %p298 = pneg %p108
        %p299 = pneg %p139
        %p300 = pneg %p136
        %s301 = smul.u32 8, %s28
        %p302 = scmp.lt.s32.totalorder %s27, 1
        %s303 = scalar_select %p302, %s27, 1
        %p304 = scmp.lt.s32.totalorder %s301, 15
        %s305 = scalar_select %p304, %s301, 15
        %s306 = smul.addr %s305, 2
        %s307 = smul.addr %s303, 32
        %s308 = sadd.s32 %s306, %s307
        %s309 = smul.addr %s308, 4
        %s310 = scalar_lea.vmem %s3, %s309
        %p311 = pneg %p167
        %p312 = pneg %p164
        %s313 = sand.u32 %s154, 1
        %s314 = scalar_lea.sflag [#allocation3], %s313
        %s315 = sand.u32 %s154, 1
        %s316 = scalar_lea.vmem [#allocation2], %s315
        %p317 = pneg %p195
        %p318 = pneg %p192
        %s319 = sand.u32 %s182, 1
        %s320 = scalar_lea.sflag [#allocation5], %s319
        %s321 = sand.u32 %s182, 1
        %s322 = scalar_lea.vmem [#allocation4], %s321
        %s323 = smul.u32 8, %s28
        %s324 = ssub.s32 18, %s323
        %p325 = scmp.lt.s32.totalorder %s324, 8
        %s326 = scalar_select %p325, %s324, 8
        %s327 = smul.u32 64, %s326
        %s328 = smul.u32 %s327, 3
        %p329 = scmp.lt.s32.totalorder %s27, 1
        %s330 = scalar_select %p329, %s27, 1
        %p331 = scmp.lt.s32.totalorder %s323, 17
        %s332 = scalar_select %p331, %s323, 17
        %s333 = smul.addr %s332, 3
        %s334 = smul.addr %s330, 54
        %s335 = sadd.s32 %s333, %s334
        %s336 = smul.addr %s335, 4
        %s337 = scalar_lea.vmem %s0, %s336
        %s338 = smul.u32 8, %s28
        %s339 = ssub.s32 18, %s338
        %p340 = scmp.lt.s32.totalorder %s339, 8
        %s341 = scalar_select %p340, %s339, 8
        %s342 = smul.u32 64, %s341
        %s343 = smul.u32 %s342, 3
        %s344 = sadd.s32 %s28, 1
        %s345 = smul.u32 %s344, 4
        %s346 = smul.u32 2, %s345
        %p347 = scmp.lt.s32.totalorder %s27, 1
        %s348 = scalar_select %p347, %s27, 1
        %p349 = scmp.lt.s32.totalorder %s346, 17
        %s350 = scalar_select %p349, %s346, 17
        %s351 = smul.addr %s350, 3
        %s352 = smul.addr %s348, 54
        %s353 = sadd.s32 %s351, %s352
        %s354 = smul.addr %s353, 4
        %s355 = scalar_lea.vmem %s1, %s354
        %s356 = sadd.s32 %s28, 1
        %s357 = smul.u32 %s356, 4
        %s358 = smul.u32 2, %s357
        %s359 = smul.u32 8, %s28
        %p360 = scmp.lt.s32.totalorder %s27, 1
        %s361 = scalar_select %p360, %s27, 1
        %p362 = scmp.lt.s32.totalorder %s359, 15
        %s363 = scalar_select %p362, %s359, 15
        %s364 = smul.addr %s363, 2
        %s365 = smul.addr %s361, 32
        %s366 = sadd.s32 %s364, %s365
        %s367 = smul.addr %s366, 4
        %s368 = scalar_lea.vmem %s3, %s367
        %s369 = smul.u32 8, %s28
        %v371 = vld [vmem:[%s337] sm:$0xf]
        %v372 = vld [vmem:[%s337 + $0x4] sm:$0xf]
        %v373 = vld [vmem:[%s337 + $0x8] sm:$0x1]
        %v374 = vld [vmem:[%s337 + $0xc] sm:$0xf]
        %v375 = vld [vmem:[%s337 + $0x10] sm:$0xf]
        %v376 = vld [vmem:[%s337 + $0x14] sm:$0x1]
        %v377 = vld [vmem:[%s337 + $0x18] sm:$0xf]
        %v378 = vld [vmem:[%s337 + $0x1c] sm:$0xf]
        %v379 = vld [vmem:[%s337 + $0x20] sm:$0x1]
        %v380 = vld [vmem:[%s337 + $0x24] sm:$0xf]
        %v381 = vld [vmem:[%s337 + $0x28] sm:$0xf]
        %v382 = vld [vmem:[%s337 + $0x2c] sm:$0x1]
        %v383 = vld [vmem:[%s337 + $0x30] sm:$0xf]
        %v384 = vld [vmem:[%s337 + $0x34] sm:$0xf]
        %v385 = vld [vmem:[%s337 + $0x38] sm:$0x1]
        %v386 = vld [vmem:[%s337 + $0x3c] sm:$0xf]
        %v387 = vld [vmem:[%s337 + $0x40] sm:$0xf]
        %v388 = vld [vmem:[%s337 + $0x44] sm:$0x1]
        %v389 = vld [vmem:[%s337 + $0x48] sm:$0xf]
        %v390 = vld [vmem:[%s337 + $0x4c] sm:$0xf]
        %v391 = vld [vmem:[%s337 + $0x50] sm:$0x1]
        %v392 = vld [vmem:[%s337 + $0x54] sm:$0xf]
        %v393 = vld [vmem:[%s337 + $0x58] sm:$0xf]
        %v394 = vld [vmem:[%s337 + $0x5c] sm:$0x1]
        %v395 = vld [vmem:[%s355] sm:$0xf]
        %v396 = vld [vmem:[%s355 + $0x4] sm:$0xf]
        %v397 = vld [vmem:[%s355 + $0x8] sm:$0x1]
        %v398 = vld [vmem:[%s355 + $0xc] sm:$0xf]
        %v399 = vld [vmem:[%s355 + $0x10] sm:$0xf]
        %v400 = vld [vmem:[%s355 + $0x14] sm:$0x1]
        %v401 = vld [vmem:[%s2] sm:$0xf]
        %v402 = vld [vmem:[%s2 + $0x4] sm:$0xf]
        %v403 = vld [vmem:[%s2 + $0x8] sm:$0xf]
        %v404 = vld [vmem:[%s2 + $0xc] sm:$0xf]
        %v405 = vld [vmem:[%s2 + $0x10] sm:$0x3]
        %v422 = vunpack.c.l.b16 %v374
        %v423 = vunpack.c.l.b16 %v375
        %v424 = vunpack.c.l.b16 %v377
        %v425 = vunpack.c.l.b16 %v378
        %v426 = vunpack.c.l.b16 %v380
        %v427 = vunpack.c.l.b16 %v381
        %v428 = vunpack.c.l.b16 %v383
        %v429 = vunpack.c.l.b16 %v384
        %v430 = vunpack.c.l.b16 %v386
        %v431 = vunpack.c.l.b16 %v387
        %v432 = vunpack.c.l.b16 %v389
        %v433 = vunpack.c.l.b16 %v390
        %v434 = vunpack.c.l.b16 %v392
        %v435 = vunpack.c.l.b16 %v393
        %v436 = vunpack.c.l.b16 %v395
        %v437 = vunpack.c.l.b16 %v396
        %v438 = vpack.c.b16 %v423, %v422
        %v439 = vpack.c.b16 %v425, %v424
        %v440 = vpack.c.b16 %v427, %v426
        %v441 = vpack.c.b16 %v429, %v428
        %v442 = vpack.c.b16 %v431, %v430
        %v443 = vpack.c.b16 %v433, %v432
        %v444 = vpack.c.b16 %v435, %v434
        %v445 = vpack.c.b16 %v437, %v436
        %v447 = vunpack.c.l.b16 %v402
        %v448 = vpack.c.b16 %v447, %v447
        %v449 = vrot.slane %v448, 2
        %vm450 = vcmask 31744
        %v452 = vsel %vm450, %v438, 0
        %v455 = vsel %vm450, %v439, 0
        %v458 = vsel %vm450, %v440, 0
        %v461 = vsel %vm450, %v441, 0
        %v464 = vsel %vm450, %v442, 0
        %v467 = vsel %vm450, %v443, 0
        %v470 = vsel %vm450, %v444, 0
        %v473 = vsel %vm450, %v445, 0
        %vm475 = vcmask 1041408
        %v477 = vsel %vm475, %v449, 0
        %479 = vmatprep.subr.bf16.mxu0 0
        %480 = vmatpush1.bf16.msra.mxu0 %v477
        %481 = vmatprep.subr.bf16.mxu0 0
        %482 = vmatpush1.bf16.msra.mxu0 0
        %483 = vmatprep.subr.bf16.mxu0 0
        %484 = vmatpush1.bf16.msra.mxu0 0
        %485 = vmatprep.subr.bf16.mxu0 0
        %486 = vmatpush1.bf16.msra.mxu0 0
        %487 = vmatprep.subr.bf16.mxu0 0
        %488 = vmatpush1.bf16.msra.mxu0 0
        %489 = vmatprep.subr.bf16.mxu0 0
        %490 = vmatpush1.bf16.msra.mxu0 0
        %491 = vmatprep.subr.bf16.mxu0 0
        %492 = vmatpush1.bf16.msra.mxu0 0
        %493 = vmatprep.subr.bf16.mxu0 0
        %494 = vmatpush1.bf16.msra.mxu0 0
        %495 = vmatprep.subr.bf16.mxu0 0
        %496 = vmatpush1.bf16.msra.mxu0 0
        %497 = vmatprep.subr.bf16.mxu0 0
        %498 = vmatpush1.bf16.msra.mxu0 0
        %499 = vmatprep.subr.bf16.mxu0 0
        %500 = vmatpush1.bf16.msra.mxu0 0
        %501 = vmatprep.subr.bf16.mxu0 0
        %502 = vmatpush1.bf16.msra.mxu0 0
        %503 = vmatprep.subr.bf16.mxu0 0
        %504 = vmatpush1.bf16.msra.mxu0 0
        %505 = vmatprep.subr.bf16.mxu0 0
        %506 = vmatpush1.bf16.msra.mxu0 0
        %507 = vmatprep.subr.bf16.mxu0 0
        %508 = vmatpush1.bf16.msra.mxu0 0
        %509 = vmatprep.subr.bf16.mxu0 0
        %510 = vmatpush1.bf16.msra.mxu0 0
        %511 = vmatprep.mubr.bf16.mxu0 0
        %512 = vmatmul.mubr.bf16.gmra.mrb[0].mxu0 %v452
        %v513 = vpop.f32.mrb[0].mxu0
        %v514 = vadd.f32 0.0, %v513
        %v515 = vpop.f32.mrb[0].mxu0
        %v516 = vpop.f32.mrb[0].mxu0
        %v517 = vadd.f32 0.0, %v516
        %v518 = vpop.f32.mrb[0].mxu0
        %519 = vmatprep.mubr.bf16.mxu0 0
        %520 = vmatmul.mubr.bf16.gmra.mrb[0].mxu0 %v455
        %v521 = vpop.f32.mrb[0].mxu0
        %v522 = vadd.f32 0.0, %v521
        %v523 = vpop.f32.mrb[0].mxu0
        %v524 = vpop.f32.mrb[0].mxu0
        %v525 = vadd.f32 0.0, %v524
        %v526 = vpop.f32.mrb[0].mxu0
        %527 = vmatprep.mubr.bf16.mxu0 0
        %528 = vmatmul.mubr.bf16.gmra.mrb[0].mxu0 %v458
        %v529 = vpop.f32.mrb[0].mxu0
        %v530 = vadd.f32 0.0, %v529
        %v531 = vpop.f32.mrb[0].mxu0
        %v532 = vpop.f32.mrb[0].mxu0
        %v533 = vadd.f32 0.0, %v532
        %v534 = vpop.f32.mrb[0].mxu0
        %535 = vmatprep.mubr.bf16.mxu0 0
        %536 = vmatmul.mubr.bf16.gmra.mrb[0].mxu0 %v461
        %v537 = vpop.f32.mrb[0].mxu0
        %v538 = vadd.f32 0.0, %v537
        %v539 = vpop.f32.mrb[0].mxu0
        %v540 = vpop.f32.mrb[0].mxu0
        %v541 = vadd.f32 0.0, %v540
        %v542 = vpop.f32.mrb[0].mxu0
        %543 = vmatprep.mubr.bf16.mxu0 0
        %544 = vmatmul.mubr.bf16.gmra.mrb[0].mxu0 %v464
        %v545 = vpop.f32.mrb[0].mxu0
        %v546 = vadd.f32 0.0, %v545
        %v547 = vpop.f32.mrb[0].mxu0
        %v548 = vpop.f32.mrb[0].mxu0
        %v549 = vadd.f32 0.0, %v548
        %v550 = vpop.f32.mrb[0].mxu0
        %551 = vmatprep.mubr.bf16.mxu0 0
        %552 = vmatmul.mubr.bf16.gmra.mrb[0].mxu0 %v467
        %v553 = vpop.f32.mrb[0].mxu0
        %v554 = vadd.f32 0.0, %v553
        %v555 = vpop.f32.mrb[0].mxu0
        %v556 = vpop.f32.mrb[0].mxu0
        %v557 = vadd.f32 0.0, %v556
        %v558 = vpop.f32.mrb[0].mxu0
        %559 = vmatprep.mubr.bf16.mxu0 0
        %560 = vmatmul.mubr.bf16.gmra.mrb[0].mxu0 %v470
        %v561 = vpop.f32.mrb[0].mxu0
        %v562 = vadd.f32 0.0, %v561
        %v563 = vpop.f32.mrb[0].mxu0
        %v564 = vpop.f32.mrb[0].mxu0
        %v565 = vadd.f32 0.0, %v564
        %v566 = vpop.f32.mrb[0].mxu0
        %567 = vmatprep.mubr.bf16.mxu0 0
        %568 = vmatmul.mubr.bf16.gmra.mrb[0].mxu0 %v473
        %v569 = vpop.f32.mrb[0].mxu0
        %v570 = vadd.f32 0.0, %v569
        %v571 = vpop.f32.mrb[0].mxu0
        %v572 = vpop.f32.mrb[0].mxu0
        %v573 = vadd.f32 0.0, %v572
        %v574 = vpop.f32.mrb[0].mxu0
        %575 = vdwg.mxu0
        %v578 = vunpack.c.l.b16 %v371
        %v579 = vunpack.c.l.b16 %v372
        %v580 = vpack.c.b16 %v579, %v578
        %v582 = vsel %vm450, %v580, 0
        %v585 = vsel %vm475, %v401, 0
        %587 = vmatprep.subr.bf16.mxu0 0
        %588 = vmatpush1.bf16.msra.mxu0 %v585
        %589 = vmatprep.subr.bf16.mxu0 0
        %590 = vmatpush1.bf16.msra.mxu0 0
        %591 = vmatprep.subr.bf16.mxu0 0
        %592 = vmatpush1.bf16.msra.mxu0 0
        %593 = vmatprep.subr.bf16.mxu0 0
        %594 = vmatpush1.bf16.msra.mxu0 0
        %595 = vmatprep.subr.bf16.mxu0 0
        %596 = vmatpush1.bf16.msra.mxu0 0
        %597 = vmatprep.subr.bf16.mxu0 0
        %598 = vmatpush1.bf16.msra.mxu0 0
        %599 = vmatprep.subr.bf16.mxu0 0
        %600 = vmatpush1.bf16.msra.mxu0 0
        %601 = vmatprep.subr.bf16.mxu0 0
        %602 = vmatpush1.bf16.msra.mxu0 0
        %603 = vmatprep.subr.bf16.mxu0 0
        %604 = vmatpush1.bf16.msra.mxu0 0
        %605 = vmatprep.subr.bf16.mxu0 0
        %606 = vmatpush1.bf16.msra.mxu0 0
        %607 = vmatprep.subr.bf16.mxu0 0
        %608 = vmatpush1.bf16.msra.mxu0 0
        %609 = vmatprep.subr.bf16.mxu0 0
        %610 = vmatpush1.bf16.msra.mxu0 0
        %611 = vmatprep.subr.bf16.mxu0 0
        %612 = vmatpush1.bf16.msra.mxu0 0
        %613 = vmatprep.subr.bf16.mxu0 0
        %614 = vmatpush1.bf16.msra.mxu0 0
        %615 = vmatprep.subr.bf16.mxu0 0
        %616 = vmatpush1.bf16.msra.mxu0 0
        %617 = vmatprep.subr.bf16.mxu0 0
        %618 = vmatpush1.bf16.msra.mxu0 0
        %619 = vmatprep.mubr.bf16.mxu0 0
        %620 = vmatmul.mubr.bf16.gmra.mrb[0].mxu0 %v582
        %v621 = vpop.f32.mrb[0].mxu0
        %v622 = vadd.f32 %v514, %v621
        %v623 = vpop.f32.mrb[0].mxu0
        %v624 = vpop.f32.mrb[0].mxu0
        %v625 = vadd.f32 %v517, %v624
        %v626 = vpop.f32.mrb[0].mxu0
        %627 = vmatprep.mubr.bf16.mxu0 0
        %628 = vmatmul.mubr.bf16.gmra.mrb[0].mxu0 %v452
        %v629 = vpop.f32.mrb[0].mxu0
        %v630 = vadd.f32 %v522, %v629
        %v631 = vpop.f32.mrb[0].mxu0
        %v632 = vpop.f32.mrb[0].mxu0
        %v633 = vadd.f32 %v525, %v632
        %v634 = vpop.f32.mrb[0].mxu0
        %635 = vmatprep.mubr.bf16.mxu0 0
        %636 = vmatmul.mubr.bf16.gmra.mrb[0].mxu0 %v455
        %v637 = vpop.f32.mrb[0].mxu0
        %v638 = vadd.f32 %v530, %v637
        %v639 = vpop.f32.mrb[0].mxu0
        %v640 = vpop.f32.mrb[0].mxu0
        %v641 = vadd.f32 %v533, %v640
        %v642 = vpop.f32.mrb[0].mxu0
        %643 = vmatprep.mubr.bf16.mxu0 0
        %644 = vmatmul.mubr.bf16.gmra.mrb[0].mxu0 %v458
        %v645 = vpop.f32.mrb[0].mxu0
        %v646 = vadd.f32 %v538, %v645
        %v647 = vpop.f32.mrb[0].mxu0
        %v648 = vpop.f32.mrb[0].mxu0
        %v649 = vadd.f32 %v541, %v648
        %v650 = vpop.f32.mrb[0].mxu0
        %651 = vmatprep.mubr.bf16.mxu0 0
        %652 = vmatmul.mubr.bf16.gmra.mrb[0].mxu0 %v461
        %v653 = vpop.f32.mrb[0].mxu0
        %v654 = vadd.f32 %v546, %v653
        %v655 = vpop.f32.mrb[0].mxu0
        %v656 = vpop.f32.mrb[0].mxu0
        %v657 = vadd.f32 %v549, %v656
        %v658 = vpop.f32.mrb[0].mxu0
        %659 = vmatprep.mubr.bf16.mxu0 0
        %660 = vmatmul.mubr.bf16.gmra.mrb[0].mxu0 %v464
        %v661 = vpop.f32.mrb[0].mxu0
        %v662 = vadd.f32 %v554, %v661
        %v663 = vpop.f32.mrb[0].mxu0
        %v664 = vpop.f32.mrb[0].mxu0
        %v665 = vadd.f32 %v557, %v664
        %v666 = vpop.f32.mrb[0].mxu0
        %667 = vmatprep.mubr.bf16.mxu0 0
        %668 = vmatmul.mubr.bf16.gmra.mrb[0].mxu0 %v467
        %v669 = vpop.f32.mrb[0].mxu0
        %v670 = vadd.f32 %v562, %v669
        %v671 = vpop.f32.mrb[0].mxu0
        %v672 = vpop.f32.mrb[0].mxu0
        %v673 = vadd.f32 %v565, %v672
        %v674 = vpop.f32.mrb[0].mxu0
        %675 = vmatprep.mubr.bf16.mxu0 0
        %676 = vmatmul.mubr.bf16.gmra.mrb[0].mxu0 %v470
        %v677 = vpop.f32.mrb[0].mxu0
        %v678 = vadd.f32 %v570, %v677
        %v679 = vpop.f32.mrb[0].mxu0
        %v680 = vpop.f32.mrb[0].mxu0
        %v681 = vadd.f32 %v573, %v680
        %v682 = vpop.f32.mrb[0].mxu0
        %683 = vdwg.mxu0
        %v686 = vunpack.c.l.b16 %v398
        %v687 = vunpack.c.l.b16 %v399
        %v688 = vpack.c.b16 %v687, %v686
        %v690 = vsel %vm450, %v688, 0
        %v693 = vsel %vm475, %v404, 0
        %695 = vmatprep.subr.bf16.mxu0 0
        %696 = vmatpush1.bf16.msra.mxu0 %v693
        %697 = vmatprep.subr.bf16.mxu0 0
        %698 = vmatpush1.bf16.msra.mxu0 0
        %699 = vmatprep.subr.bf16.mxu0 0
        %700 = vmatpush1.bf16.msra.mxu0 0
        %701 = vmatprep.subr.bf16.mxu0 0
        %702 = vmatpush1.bf16.msra.mxu0 0
        %703 = vmatprep.subr.bf16.mxu0 0
        %704 = vmatpush1.bf16.msra.mxu0 0
        %705 = vmatprep.subr.bf16.mxu0 0
        %706 = vmatpush1.bf16.msra.mxu0 0
        %707 = vmatprep.subr.bf16.mxu0 0
        %708 = vmatpush1.bf16.msra.mxu0 0
        %709 = vmatprep.subr.bf16.mxu0 0
        %710 = vmatpush1.bf16.msra.mxu0 0
        %711 = vmatprep.subr.bf16.mxu0 0
        %712 = vmatpush1.bf16.msra.mxu0 0
        %713 = vmatprep.subr.bf16.mxu0 0
        %714 = vmatpush1.bf16.msra.mxu0 0
        %715 = vmatprep.subr.bf16.mxu0 0
        %716 = vmatpush1.bf16.msra.mxu0 0
        %717 = vmatprep.subr.bf16.mxu0 0
        %718 = vmatpush1.bf16.msra.mxu0 0
        %719 = vmatprep.subr.bf16.mxu0 0
        %720 = vmatpush1.bf16.msra.mxu0 0
        %721 = vmatprep.subr.bf16.mxu0 0
        %722 = vmatpush1.bf16.msra.mxu0 0
        %723 = vmatprep.subr.bf16.mxu0 0
        %724 = vmatpush1.bf16.msra.mxu0 0
        %725 = vmatprep.subr.bf16.mxu0 0
        %726 = vmatpush1.bf16.msra.mxu0 0
        %727 = vmatprep.mubr.bf16.mxu0 0
        %728 = vmatmul.mubr.bf16.gmra.mrb[0].mxu0 %v455
        %v729 = vpop.f32.mrb[0].mxu0
        %v730 = vadd.f32 0.0, %v729
        %v731 = vpop.f32.mrb[0].mxu0
        %v732 = vpop.f32.mrb[0].mxu0
        %v733 = vadd.f32 0.0, %v732
        %v734 = vpop.f32.mrb[0].mxu0
        %735 = vmatprep.mubr.bf16.mxu0 0
        %736 = vmatmul.mubr.bf16.gmra.mrb[0].mxu0 %v458
        %v737 = vpop.f32.mrb[0].mxu0
        %v738 = vadd.f32 0.0, %v737
        %v739 = vpop.f32.mrb[0].mxu0
        %v740 = vpop.f32.mrb[0].mxu0
        %v741 = vadd.f32 0.0, %v740
        %v742 = vpop.f32.mrb[0].mxu0
        %743 = vmatprep.mubr.bf16.mxu0 0
        %744 = vmatmul.mubr.bf16.gmra.mrb[0].mxu0 %v461
        %v745 = vpop.f32.mrb[0].mxu0
        %v746 = vadd.f32 0.0, %v745
        %v747 = vpop.f32.mrb[0].mxu0
        %v748 = vpop.f32.mrb[0].mxu0
        %v749 = vadd.f32 0.0, %v748
        %v750 = vpop.f32.mrb[0].mxu0
        %751 = vmatprep.mubr.bf16.mxu0 0
        %752 = vmatmul.mubr.bf16.gmra.mrb[0].mxu0 %v464
        %v753 = vpop.f32.mrb[0].mxu0
        %v754 = vadd.f32 0.0, %v753
        %v755 = vpop.f32.mrb[0].mxu0
        %v756 = vpop.f32.mrb[0].mxu0
        %v757 = vadd.f32 0.0, %v756
        %v758 = vpop.f32.mrb[0].mxu0
        %759 = vmatprep.mubr.bf16.mxu0 0
        %760 = vmatmul.mubr.bf16.gmra.mrb[0].mxu0 %v467
        %v761 = vpop.f32.mrb[0].mxu0
        %v762 = vadd.f32 0.0, %v761
        %v763 = vpop.f32.mrb[0].mxu0
        %v764 = vpop.f32.mrb[0].mxu0
        %v765 = vadd.f32 0.0, %v764
        %v766 = vpop.f32.mrb[0].mxu0
        %767 = vmatprep.mubr.bf16.mxu0 0
        %768 = vmatmul.mubr.bf16.gmra.mrb[0].mxu0 %v470
        %v769 = vpop.f32.mrb[0].mxu0
        %v770 = vadd.f32 0.0, %v769
        %v771 = vpop.f32.mrb[0].mxu0
        %v772 = vpop.f32.mrb[0].mxu0
        %v773 = vadd.f32 0.0, %v772
        %v774 = vpop.f32.mrb[0].mxu0
        %775 = vmatprep.mubr.bf16.mxu0 0
        %776 = vmatmul.mubr.bf16.gmra.mrb[0].mxu0 %v473
        %v777 = vpop.f32.mrb[0].mxu0
        %v778 = vadd.f32 0.0, %v777
        %v779 = vpop.f32.mrb[0].mxu0
        %v780 = vpop.f32.mrb[0].mxu0
        %v781 = vadd.f32 0.0, %v780
        %v782 = vpop.f32.mrb[0].mxu0
        %783 = vmatprep.mubr.bf16.mxu0 0
        %784 = vmatmul.mubr.bf16.gmra.mrb[0].mxu0 %v690
        %v785 = vpop.f32.mrb[0].mxu0
        %v786 = vadd.f32 0.0, %v785
        %v787 = vpop.f32.mrb[0].mxu0
        %v788 = vpop.f32.mrb[0].mxu0
        %v789 = vadd.f32 0.0, %v788
        %v790 = vpop.f32.mrb[0].mxu0
        %791 = vdwg.mxu0
        %v792 = vadd.f32 %v622, %v730
        %v793 = vadd.f32 %v625, %v733
        %v794 = vadd.f32 %v630, %v738
        %v795 = vadd.f32 %v633, %v741
        %v796 = vadd.f32 %v638, %v746
        %v797 = vadd.f32 %v641, %v749
        %v798 = vadd.f32 %v646, %v754
        %v799 = vadd.f32 %v649, %v757
        %v800 = vadd.f32 %v654, %v762
        %v801 = vadd.f32 %v657, %v765
        %v802 = vadd.f32 %v662, %v770
        %v803 = vadd.f32 %v665, %v773
        %v804 = vadd.f32 %v670, %v778
        %v805 = vadd.f32 %v673, %v781
        %v806 = vadd.f32 %v678, %v786
        %v807 = vadd.f32 %v681, %v789
        %vm808 = vsmask.f32 3328
        %vm809 = vsmask.f32 7440
        %vm810 = vmor %vm808, %vm809
        %v812 = vshrl.u32 %v371, 16
        %v814 = vrot.slane %v812, 4
        %v815 = vshll.u32 %v371, 16
        %v817 = vrot.slane %v815, 5
        %v818 = vor.u32 %v814, %v817
        %v819 = vrot.slane %v818, 4
        %v821 = vshll.u32 %v372, 16
        %v823 = vrot.slane %v821, 5
        %v824 = vsel %vm810, %v819, %v823
        %v825 = vshrl.u32 %v372, 16
        %v827 = vrot.slane %v825, 4
        %v828 = vor.u32 %v827, %v823
        %v829 = vrot.slane %v828, 4
        %v831 = vshll.u32 %v373, 16
        %v833 = vrot.slane %v831, 5
        %v834 = vsel %vm810, %v829, %v833
        %v836 = vshrl.u32 %v374, 16
        %v838 = vrot.slane %v836, 4
        %v839 = vshll.u32 %v374, 16
        %v841 = vrot.slane %v839, 5
        %v842 = vor.u32 %v838, %v841
        %v843 = vrot.slane %v842, 4
        %v845 = vshll.u32 %v375, 16
        %v847 = vrot.slane %v845, 5
        %v848 = vsel %vm810, %v843, %v847
        %v849 = vshrl.u32 %v375, 16
        %v851 = vrot.slane %v849, 4
        %v852 = vor.u32 %v851, %v847
        %v853 = vrot.slane %v852, 4
        %v855 = vshll.u32 %v376, 16
        %v857 = vrot.slane %v855, 5
        %v858 = vsel %vm810, %v853, %v857
        %v860 = vshrl.u32 %v377, 16
        %v862 = vrot.slane %v860, 4
        %v863 = vshll.u32 %v377, 16
        %v865 = vrot.slane %v863, 5
        %v866 = vor.u32 %v862, %v865
        %v867 = vrot.slane %v866, 4
        %v869 = vshll.u32 %v378, 16
        %v871 = vrot.slane %v869, 5
        %v872 = vsel %vm810, %v867, %v871
        %v873 = vshrl.u32 %v378, 16
        %v875 = vrot.slane %v873, 4
        %v876 = vor.u32 %v875, %v871
        %v877 = vrot.slane %v876, 4
        %v879 = vshll.u32 %v379, 16
        %v881 = vrot.slane %v879, 5
        %v882 = vsel %vm810, %v877, %v881
        %v884 = vshrl.u32 %v380, 16
        %v886 = vrot.slane %v884, 4
        %v887 = vshll.u32 %v380, 16
        %v889 = vrot.slane %v887, 5
        %v890 = vor.u32 %v886, %v889
        %v891 = vrot.slane %v890, 4
        %v893 = vshll.u32 %v381, 16
        %v895 = vrot.slane %v893, 5
        %v896 = vsel %vm810, %v891, %v895
        %v897 = vshrl.u32 %v381, 16
        %v899 = vrot.slane %v897, 4
        %v900 = vor.u32 %v899, %v895
        %v901 = vrot.slane %v900, 4
        %v903 = vshll.u32 %v382, 16
        %v905 = vrot.slane %v903, 5
        %v906 = vsel %vm810, %v901, %v905
        %v908 = vshrl.u32 %v383, 16
        %v910 = vrot.slane %v908, 4
        %v911 = vshll.u32 %v383, 16
        %v913 = vrot.slane %v911, 5
        %v914 = vor.u32 %v910, %v913
        %v915 = vrot.slane %v914, 4
        %v917 = vshll.u32 %v384, 16
        %v919 = vrot.slane %v917, 5
        %v920 = vsel %vm810, %v915, %v919
        %v921 = vshrl.u32 %v384, 16
        %v923 = vrot.slane %v921, 4
        %v924 = vor.u32 %v923, %v919
        %v925 = vrot.slane %v924, 4
        %v927 = vshll.u32 %v385, 16
        %v929 = vrot.slane %v927, 5
        %v930 = vsel %vm810, %v925, %v929
        %v932 = vshrl.u32 %v386, 16
        %v934 = vrot.slane %v932, 4
        %v935 = vshll.u32 %v386, 16
        %v937 = vrot.slane %v935, 5
        %v938 = vor.u32 %v934, %v937
        %v939 = vrot.slane %v938, 4
        %v941 = vshll.u32 %v387, 16
        %v943 = vrot.slane %v941, 5
        %v944 = vsel %vm810, %v939, %v943
        %v945 = vshrl.u32 %v387, 16
        %v947 = vrot.slane %v945, 4
        %v948 = vor.u32 %v947, %v943
        %v949 = vrot.slane %v948, 4
        %v951 = vshll.u32 %v388, 16
        %v953 = vrot.slane %v951, 5
        %v954 = vsel %vm810, %v949, %v953
        %v956 = vshrl.u32 %v389, 16
        %v958 = vrot.slane %v956, 4
        %v959 = vshll.u32 %v389, 16
        %v961 = vrot.slane %v959, 5
        %v962 = vor.u32 %v958, %v961
        %v963 = vrot.slane %v962, 4
        %v965 = vshll.u32 %v390, 16
        %v967 = vrot.slane %v965, 5
        %v968 = vsel %vm810, %v963, %v967
        %v969 = vshrl.u32 %v390, 16
        %v971 = vrot.slane %v969, 4
        %v972 = vor.u32 %v971, %v967
        %v973 = vrot.slane %v972, 4
        %v975 = vshll.u32 %v391, 16
        %v977 = vrot.slane %v975, 5
        %v978 = vsel %vm810, %v973, %v977
        %v980 = vshrl.u32 %v392, 16
        %v982 = vrot.slane %v980, 4
        %v983 = vshll.u32 %v392, 16
        %v985 = vrot.slane %v983, 5
        %v986 = vor.u32 %v982, %v985
        %v987 = vrot.slane %v986, 4
        %v989 = vshll.u32 %v393, 16
        %v991 = vrot.slane %v989, 5
        %v992 = vsel %vm810, %v987, %v991
        %v993 = vshrl.u32 %v393, 16
        %v995 = vrot.slane %v993, 4
        %v996 = vor.u32 %v995, %v991
        %v997 = vrot.slane %v996, 4
        %v999 = vshll.u32 %v394, 16
        %v1001 = vrot.slane %v999, 5
        %v1002 = vsel %vm810, %v997, %v1001
        %v1004 = vshrl.u32 %v395, 16
        %v1006 = vrot.slane %v1004, 4
        %v1007 = vshll.u32 %v395, 16
        %v1009 = vrot.slane %v1007, 5
        %v1010 = vor.u32 %v1006, %v1009
        %v1011 = vrot.slane %v1010, 4
        %v1013 = vshll.u32 %v396, 16
        %v1015 = vrot.slane %v1013, 5
        %v1016 = vsel %vm810, %v1011, %v1015
        %v1017 = vshrl.u32 %v396, 16
        %v1019 = vrot.slane %v1017, 4
        %v1020 = vor.u32 %v1019, %v1015
        %v1021 = vrot.slane %v1020, 4
        %v1023 = vshll.u32 %v397, 16
        %v1025 = vrot.slane %v1023, 5
        %v1026 = vsel %vm810, %v1021, %v1025
        %v1028 = vshrl.u32 %v398, 16
        %v1030 = vrot.slane %v1028, 4
        %v1031 = vshll.u32 %v398, 16
        %v1033 = vrot.slane %v1031, 5
        %v1034 = vor.u32 %v1030, %v1033
        %v1035 = vrot.slane %v1034, 4
        %v1037 = vshll.u32 %v399, 16
        %v1039 = vrot.slane %v1037, 5
        %v1040 = vsel %vm810, %v1035, %v1039
        %v1041 = vshrl.u32 %v399, 16
        %v1043 = vrot.slane %v1041, 4
        %v1044 = vor.u32 %v1043, %v1039
        %v1045 = vrot.slane %v1044, 4
        %v1047 = vshll.u32 %v400, 16
        %v1049 = vrot.slane %v1047, 5
        %v1050 = vsel %vm810, %v1045, %v1049
        %v1051 = vunpack.c.l.b16 %v824
        %v1052 = vunpack.c.l.b16 %v834
        %v1053 = vunpack.c.l.b16 %v848
        %v1054 = vunpack.c.l.b16 %v858
        %v1055 = vunpack.c.l.b16 %v872
        %v1056 = vunpack.c.l.b16 %v882
        %v1057 = vunpack.c.l.b16 %v896
        %v1058 = vunpack.c.l.b16 %v906
        %v1059 = vunpack.c.l.b16 %v920
        %v1060 = vunpack.c.l.b16 %v930
        %v1061 = vunpack.c.l.b16 %v944
        %v1062 = vunpack.c.l.b16 %v954
        %v1063 = vunpack.c.l.b16 %v968
        %v1064 = vunpack.c.l.b16 %v978
        %v1065 = vunpack.c.l.b16 %v992
        %v1066 = vunpack.c.l.b16 %v1002
        %v1067 = vpack.c.b16 %v1052, %v1051
        %v1068 = vpack.c.b16 %v1054, %v1053
        %v1069 = vpack.c.b16 %v1056, %v1055
        %v1070 = vpack.c.b16 %v1058, %v1057
        %v1071 = vpack.c.b16 %v1060, %v1059
        %v1072 = vpack.c.b16 %v1062, %v1061
        %v1073 = vpack.c.b16 %v1064, %v1063
        %v1074 = vpack.c.b16 %v1066, %v1065
        %v1076 = vunpack.c.l.b16 %v401
        %v1077 = vpack.c.b16 %v1076, %v1076
        %v1078 = vrot.slane %v1077, 2
        %v1080 = vsel %vm450, %v1067, 0
        %v1083 = vsel %vm450, %v1068, 0
        %v1086 = vsel %vm450, %v1069, 0
        %v1089 = vsel %vm450, %v1070, 0
        %v1092 = vsel %vm450, %v1071, 0
        %v1095 = vsel %vm450, %v1072, 0
        %v1098 = vsel %vm450, %v1073, 0
        %v1101 = vsel %vm450, %v1074, 0
        %v1104 = vsel %vm475, %v1078, 0
        %1106 = vmatprep.subr.bf16.mxu0 0
        %1107 = vmatpush1.bf16.msra.mxu0 %v1104
        %1108 = vmatprep.subr.bf16.mxu0 0
        %1109 = vmatpush1.bf16.msra.mxu0 0
        %1110 = vmatprep.subr.bf16.mxu0 0
        %1111 = vmatpush1.bf16.msra.mxu0 0
        %1112 = vmatprep.subr.bf16.mxu0 0
        %1113 = vmatpush1.bf16.msra.mxu0 0
        %1114 = vmatprep.subr.bf16.mxu0 0
        %1115 = vmatpush1.bf16.msra.mxu0 0
        %1116 = vmatprep.subr.bf16.mxu0 0
        %1117 = vmatpush1.bf16.msra.mxu0 0
        %1118 = vmatprep.subr.bf16.mxu0 0
        %1119 = vmatpush1.bf16.msra.mxu0 0
        %1120 = vmatprep.subr.bf16.mxu0 0
        %1121 = vmatpush1.bf16.msra.mxu0 0
        %1122 = vmatprep.subr.bf16.mxu0 0
        %1123 = vmatpush1.bf16.msra.mxu0 0
        %1124 = vmatprep.subr.bf16.mxu0 0
        %1125 = vmatpush1.bf16.msra.mxu0 0
        %1126 = vmatprep.subr.bf16.mxu0 0
        %1127 = vmatpush1.bf16.msra.mxu0 0
        %1128 = vmatprep.subr.bf16.mxu0 0
        %1129 = vmatpush1.bf16.msra.mxu0 0
        %1130 = vmatprep.subr.bf16.mxu0 0
        %1131 = vmatpush1.bf16.msra.mxu0 0
        %1132 = vmatprep.subr.bf16.mxu0 0
        %1133 = vmatpush1.bf16.msra.mxu0 0
        %1134 = vmatprep.subr.bf16.mxu0 0
        %1135 = vmatpush1.bf16.msra.mxu0 0
        %1136 = vmatprep.subr.bf16.mxu0 0
        %1137 = vmatpush1.bf16.msra.mxu0 0
        %1138 = vmatprep.mubr.bf16.mxu0 0
        %1139 = vmatmul.mubr.bf16.gmra.mrb[0].mxu0 %v1080
        %v1140 = vpop.f32.mrb[0].mxu0
        %v1141 = vadd.f32 0.0, %v1140
        %v1142 = vpop.f32.mrb[0].mxu0
        %v1143 = vpop.f32.mrb[0].mxu0
        %v1144 = vadd.f32 0.0, %v1143
        %v1145 = vpop.f32.mrb[0].mxu0
        %1146 = vmatprep.mubr.bf16.mxu0 0
        %1147 = vmatmul.mubr.bf16.gmra.mrb[0].mxu0 %v1083
        %v1148 = vpop.f32.mrb[0].mxu0
        %v1149 = vadd.f32 0.0, %v1148
        %v1150 = vpop.f32.mrb[0].mxu0
        %v1151 = vpop.f32.mrb[0].mxu0
        %v1152 = vadd.f32 0.0, %v1151
        %v1153 = vpop.f32.mrb[0].mxu0
        %1154 = vmatprep.mubr.bf16.mxu0 0
        %1155 = vmatmul.mubr.bf16.gmra.mrb[0].mxu0 %v1086
        %v1156 = vpop.f32.mrb[0].mxu0
        %v1157 = vadd.f32 0.0, %v1156
        %v1158 = vpop.f32.mrb[0].mxu0
        %v1159 = vpop.f32.mrb[0].mxu0
        %v1160 = vadd.f32 0.0, %v1159
        %v1161 = vpop.f32.mrb[0].mxu0
        %1162 = vmatprep.mubr.bf16.mxu0 0
        %1163 = vmatmul.mubr.bf16.gmra.mrb[0].mxu0 %v1089
        %v1164 = vpop.f32.mrb[0].mxu0
        %v1165 = vadd.f32 0.0, %v1164
        %v1166 = vpop.f32.mrb[0].mxu0
        %v1167 = vpop.f32.mrb[0].mxu0
        %v1168 = vadd.f32 0.0, %v1167
        %v1169 = vpop.f32.mrb[0].mxu0
        %1170 = vmatprep.mubr.bf16.mxu0 0
        %1171 = vmatmul.mubr.bf16.gmra.mrb[0].mxu0 %v1092
        %v1172 = vpop.f32.mrb[0].mxu0
        %v1173 = vadd.f32 0.0, %v1172
        %v1174 = vpop.f32.mrb[0].mxu0
        %v1175 = vpop.f32.mrb[0].mxu0
        %v1176 = vadd.f32 0.0, %v1175
        %v1177 = vpop.f32.mrb[0].mxu0
        %1178 = vmatprep.mubr.bf16.mxu0 0
        %1179 = vmatmul.mubr.bf16.gmra.mrb[0].mxu0 %v1095
        %v1180 = vpop.f32.mrb[0].mxu0
        %v1181 = vadd.f32 0.0, %v1180
        %v1182 = vpop.f32.mrb[0].mxu0
        %v1183 = vpop.f32.mrb[0].mxu0
        %v1184 = vadd.f32 0.0, %v1183
        %v1185 = vpop.f32.mrb[0].mxu0
        %1186 = vmatprep.mubr.bf16.mxu0 0
        %1187 = vmatmul.mubr.bf16.gmra.mrb[0].mxu0 %v1098
        %v1188 = vpop.f32.mrb[0].mxu0
        %v1189 = vadd.f32 0.0, %v1188
        %v1190 = vpop.f32.mrb[0].mxu0
        %v1191 = vpop.f32.mrb[0].mxu0
        %v1192 = vadd.f32 0.0, %v1191
        %v1193 = vpop.f32.mrb[0].mxu0
        %1194 = vmatprep.mubr.bf16.mxu0 0
        %1195 = vmatmul.mubr.bf16.gmra.mrb[0].mxu0 %v1101
        %v1196 = vpop.f32.mrb[0].mxu0
        %v1197 = vadd.f32 0.0, %v1196
        %v1198 = vpop.f32.mrb[0].mxu0
        %v1199 = vpop.f32.mrb[0].mxu0
        %v1200 = vadd.f32 0.0, %v1199
        %v1201 = vpop.f32.mrb[0].mxu0
        %1202 = vdwg.mxu0
        %v1203 = vadd.f32 %v792, %v1141
        %v1204 = vadd.f32 %v793, %v1144
        %v1205 = vadd.f32 %v794, %v1149
        %v1206 = vadd.f32 %v795, %v1152
        %v1207 = vadd.f32 %v796, %v1157
        %v1208 = vadd.f32 %v797, %v1160
        %v1209 = vadd.f32 %v798, %v1165
        %v1210 = vadd.f32 %v799, %v1168
        %v1211 = vadd.f32 %v800, %v1173
        %v1212 = vadd.f32 %v801, %v1176
        %v1213 = vadd.f32 %v802, %v1181
        %v1214 = vadd.f32 %v803, %v1184
        %v1215 = vadd.f32 %v804, %v1189
        %v1216 = vadd.f32 %v805, %v1192
        %v1217 = vadd.f32 %v806, %v1197
        %v1218 = vadd.f32 %v807, %v1200
        %v1219 = vunpack.c.l.b16 %v1016
        %v1220 = vunpack.c.l.b16 %v1026
        %v1221 = vpack.c.b16 %v1220, %v1219
        %v1223 = vsel %vm450, %v1221, 0
        %v1226 = vsel %vm475, %v403, 0
        %1228 = vmatprep.subr.bf16.mxu0 0
        %1229 = vmatpush1.bf16.msra.mxu0 %v1226
        %1230 = vmatprep.subr.bf16.mxu0 0
        %1231 = vmatpush1.bf16.msra.mxu0 0
        %1232 = vmatprep.subr.bf16.mxu0 0
        %1233 = vmatpush1.bf16.msra.mxu0 0
        %1234 = vmatprep.subr.bf16.mxu0 0
        %1235 = vmatpush1.bf16.msra.mxu0 0
        %1236 = vmatprep.subr.bf16.mxu0 0
        %1237 = vmatpush1.bf16.msra.mxu0 0
        %1238 = vmatprep.subr.bf16.mxu0 0
        %1239 = vmatpush1.bf16.msra.mxu0 0
        %1240 = vmatprep.subr.bf16.mxu0 0
        %1241 = vmatpush1.bf16.msra.mxu0 0
        %1242 = vmatprep.subr.bf16.mxu0 0
        %1243 = vmatpush1.bf16.msra.mxu0 0
        %1244 = vmatprep.subr.bf16.mxu0 0
        %1245 = vmatpush1.bf16.msra.mxu0 0
        %1246 = vmatprep.subr.bf16.mxu0 0
        %1247 = vmatpush1.bf16.msra.mxu0 0
        %1248 = vmatprep.subr.bf16.mxu0 0
        %1249 = vmatpush1.bf16.msra.mxu0 0
        %1250 = vmatprep.subr.bf16.mxu0 0
        %1251 = vmatpush1.bf16.msra.mxu0 0
        %1252 = vmatprep.subr.bf16.mxu0 0
        %1253 = vmatpush1.bf16.msra.mxu0 0
        %1254 = vmatprep.subr.bf16.mxu0 0
        %1255 = vmatpush1.bf16.msra.mxu0 0
        %1256 = vmatprep.subr.bf16.mxu0 0
        %1257 = vmatpush1.bf16.msra.mxu0 0
        %1258 = vmatprep.subr.bf16.mxu0 0
        %1259 = vmatpush1.bf16.msra.mxu0 0
        %1260 = vmatprep.mubr.bf16.mxu0 0
        %1261 = vmatmul.mubr.bf16.gmra.mrb[0].mxu0 %v1083
        %v1262 = vpop.f32.mrb[0].mxu0
        %v1263 = vadd.f32 0.0, %v1262
        %v1264 = vpop.f32.mrb[0].mxu0
        %v1265 = vpop.f32.mrb[0].mxu0
        %v1266 = vadd.f32 0.0, %v1265
        %v1267 = vpop.f32.mrb[0].mxu0
        %1268 = vmatprep.mubr.bf16.mxu0 0
        %1269 = vmatmul.mubr.bf16.gmra.mrb[0].mxu0 %v1086
        %v1270 = vpop.f32.mrb[0].mxu0
        %v1271 = vadd.f32 0.0, %v1270
        %v1272 = vpop.f32.mrb[0].mxu0
        %v1273 = vpop.f32.mrb[0].mxu0
        %v1274 = vadd.f32 0.0, %v1273
        %v1275 = vpop.f32.mrb[0].mxu0
        %1276 = vmatprep.mubr.bf16.mxu0 0
        %1277 = vmatmul.mubr.bf16.gmra.mrb[0].mxu0 %v1089
        %v1278 = vpop.f32.mrb[0].mxu0
        %v1279 = vadd.f32 0.0, %v1278
        %v1280 = vpop.f32.mrb[0].mxu0
        %v1281 = vpop.f32.mrb[0].mxu0
        %v1282 = vadd.f32 0.0, %v1281
        %v1283 = vpop.f32.mrb[0].mxu0
        %1284 = vmatprep.mubr.bf16.mxu0 0
        %1285 = vmatmul.mubr.bf16.gmra.mrb[0].mxu0 %v1092
        %v1286 = vpop.f32.mrb[0].mxu0
        %v1287 = vadd.f32 0.0, %v1286
        %v1288 = vpop.f32.mrb[0].mxu0
        %v1289 = vpop.f32.mrb[0].mxu0
        %v1290 = vadd.f32 0.0, %v1289
        %v1291 = vpop.f32.mrb[0].mxu0
        %1292 = vmatprep.mubr.bf16.mxu0 0
        %1293 = vmatmul.mubr.bf16.gmra.mrb[0].mxu0 %v1095
        %v1294 = vpop.f32.mrb[0].mxu0
        %v1295 = vadd.f32 0.0, %v1294
        %v1296 = vpop.f32.mrb[0].mxu0
        %v1297 = vpop.f32.mrb[0].mxu0
        %v1298 = vadd.f32 0.0, %v1297
        %v1299 = vpop.f32.mrb[0].mxu0
        %1300 = vmatprep.mubr.bf16.mxu0 0
        %1301 = vmatmul.mubr.bf16.gmra.mrb[0].mxu0 %v1098
        %v1302 = vpop.f32.mrb[0].mxu0
        %v1303 = vadd.f32 0.0, %v1302
        %v1304 = vpop.f32.mrb[0].mxu0
        %v1305 = vpop.f32.mrb[0].mxu0
        %v1306 = vadd.f32 0.0, %v1305
        %v1307 = vpop.f32.mrb[0].mxu0
        %1308 = vmatprep.mubr.bf16.mxu0 0
        %1309 = vmatmul.mubr.bf16.gmra.mrb[0].mxu0 %v1101
        %v1310 = vpop.f32.mrb[0].mxu0
        %v1311 = vadd.f32 0.0, %v1310
        %v1312 = vpop.f32.mrb[0].mxu0
        %v1313 = vpop.f32.mrb[0].mxu0
        %v1314 = vadd.f32 0.0, %v1313
        %v1315 = vpop.f32.mrb[0].mxu0
        %1316 = vmatprep.mubr.bf16.mxu0 0
        %1317 = vmatmul.mubr.bf16.gmra.mrb[0].mxu0 %v1223
        %v1318 = vpop.f32.mrb[0].mxu0
        %v1319 = vadd.f32 0.0, %v1318
        %v1320 = vpop.f32.mrb[0].mxu0
        %v1321 = vpop.f32.mrb[0].mxu0
        %v1322 = vadd.f32 0.0, %v1321
        %v1323 = vpop.f32.mrb[0].mxu0
        %1324 = vdwg.mxu0
        %v1325 = vadd.f32 %v1203, %v1263
        %v1326 = vadd.f32 %v1204, %v1266
        %v1327 = vadd.f32 %v1205, %v1271
        %v1328 = vadd.f32 %v1206, %v1274
        %v1329 = vadd.f32 %v1207, %v1279
        %v1330 = vadd.f32 %v1208, %v1282
        %v1331 = vadd.f32 %v1209, %v1287
        %v1332 = vadd.f32 %v1210, %v1290
        %v1333 = vadd.f32 %v1211, %v1295
        %v1334 = vadd.f32 %v1212, %v1298
        %v1335 = vadd.f32 %v1213, %v1303
        %v1336 = vadd.f32 %v1214, %v1306
        %v1337 = vadd.f32 %v1215, %v1311
        %v1338 = vadd.f32 %v1216, %v1314
        %v1339 = vadd.f32 %v1217, %v1319
        %v1340 = vadd.f32 %v1218, %v1322
        %v1341 = vunpack.c.l.b16 %v1040
        %v1342 = vunpack.c.l.b16 %v1050
        %v1343 = vpack.c.b16 %v1342, %v1341
        %v1345 = vunpack.c.l.b16 %v404
        %v1346 = vpack.c.b16 %v1345, %v1345
        %v1347 = vrot.slane %v1346, 2
        %v1349 = vsel %vm450, %v1343, 0
        %v1352 = vsel %vm475, %v1347, 0
        %1354 = vmatprep.subr.bf16.mxu0 0
        %1355 = vmatpush1.bf16.msra.mxu0 %v1352
        %1356 = vmatprep.subr.bf16.mxu0 0
        %1357 = vmatpush1.bf16.msra.mxu0 0
        %1358 = vmatprep.subr.bf16.mxu0 0
        %1359 = vmatpush1.bf16.msra.mxu0 0
        %1360 = vmatprep.subr.bf16.mxu0 0
        %1361 = vmatpush1.bf16.msra.mxu0 0
        %1362 = vmatprep.subr.bf16.mxu0 0
        %1363 = vmatpush1.bf16.msra.mxu0 0
        %1364 = vmatprep.subr.bf16.mxu0 0
        %1365 = vmatpush1.bf16.msra.mxu0 0
        %1366 = vmatprep.subr.bf16.mxu0 0
        %1367 = vmatpush1.bf16.msra.mxu0 0
        %1368 = vmatprep.subr.bf16.mxu0 0
        %1369 = vmatpush1.bf16.msra.mxu0 0
        %1370 = vmatprep.subr.bf16.mxu0 0
        %1371 = vmatpush1.bf16.msra.mxu0 0
        %1372 = vmatprep.subr.bf16.mxu0 0
        %1373 = vmatpush1.bf16.msra.mxu0 0
        %1374 = vmatprep.subr.bf16.mxu0 0
        %1375 = vmatpush1.bf16.msra.mxu0 0
        %1376 = vmatprep.subr.bf16.mxu0 0
        %1377 = vmatpush1.bf16.msra.mxu0 0
        %1378 = vmatprep.subr.bf16.mxu0 0
        %1379 = vmatpush1.bf16.msra.mxu0 0
        %1380 = vmatprep.subr.bf16.mxu0 0
        %1381 = vmatpush1.bf16.msra.mxu0 0
        %1382 = vmatprep.subr.bf16.mxu0 0
        %1383 = vmatpush1.bf16.msra.mxu0 0
        %1384 = vmatprep.subr.bf16.mxu0 0
        %1385 = vmatpush1.bf16.msra.mxu0 0
        %1386 = vmatprep.mubr.bf16.mxu0 0
        %1387 = vmatmul.mubr.bf16.gmra.mrb[0].mxu0 %v1086
        %v1388 = vpop.f32.mrb[0].mxu0
        %v1389 = vadd.f32 0.0, %v1388
        %v1390 = vpop.f32.mrb[0].mxu0
        %v1391 = vpop.f32.mrb[0].mxu0
        %v1392 = vadd.f32 0.0, %v1391
        %v1393 = vpop.f32.mrb[0].mxu0
        %1394 = vmatprep.mubr.bf16.mxu0 0
        %1395 = vmatmul.mubr.bf16.gmra.mrb[0].mxu0 %v1089
        %v1396 = vpop.f32.mrb[0].mxu0
        %v1397 = vadd.f32 0.0, %v1396
        %v1398 = vpop.f32.mrb[0].mxu0
        %v1399 = vpop.f32.mrb[0].mxu0
        %v1400 = vadd.f32 0.0, %v1399
        %v1401 = vpop.f32.mrb[0].mxu0
        %1402 = vmatprep.mubr.bf16.mxu0 0
        %1403 = vmatmul.mubr.bf16.gmra.mrb[0].mxu0 %v1092
        %v1404 = vpop.f32.mrb[0].mxu0
        %v1405 = vadd.f32 0.0, %v1404
        %v1406 = vpop.f32.mrb[0].mxu0
        %v1407 = vpop.f32.mrb[0].mxu0
        %v1408 = vadd.f32 0.0, %v1407
        %v1409 = vpop.f32.mrb[0].mxu0
        %1410 = vmatprep.mubr.bf16.mxu0 0
        %1411 = vmatmul.mubr.bf16.gmra.mrb[0].mxu0 %v1095
        %v1412 = vpop.f32.mrb[0].mxu0
        %v1413 = vadd.f32 0.0, %v1412
        %v1414 = vpop.f32.mrb[0].mxu0
        %v1415 = vpop.f32.mrb[0].mxu0
        %v1416 = vadd.f32 0.0, %v1415
        %v1417 = vpop.f32.mrb[0].mxu0
        %1418 = vmatprep.mubr.bf16.mxu0 0
        %1419 = vmatmul.mubr.bf16.gmra.mrb[0].mxu0 %v1098
        %v1420 = vpop.f32.mrb[0].mxu0
        %v1421 = vadd.f32 0.0, %v1420
        %v1422 = vpop.f32.mrb[0].mxu0
        %v1423 = vpop.f32.mrb[0].mxu0
        %v1424 = vadd.f32 0.0, %v1423
        %v1425 = vpop.f32.mrb[0].mxu0
        %1426 = vmatprep.mubr.bf16.mxu0 0
        %1427 = vmatmul.mubr.bf16.gmra.mrb[0].mxu0 %v1101
        %v1428 = vpop.f32.mrb[0].mxu0
        %v1429 = vadd.f32 0.0, %v1428
        %v1430 = vpop.f32.mrb[0].mxu0
        %v1431 = vpop.f32.mrb[0].mxu0
        %v1432 = vadd.f32 0.0, %v1431
        %v1433 = vpop.f32.mrb[0].mxu0
        %1434 = vmatprep.mubr.bf16.mxu0 0
        %1435 = vmatmul.mubr.bf16.gmra.mrb[0].mxu0 %v1223
        %v1436 = vpop.f32.mrb[0].mxu0
        %v1437 = vadd.f32 0.0, %v1436
        %v1438 = vpop.f32.mrb[0].mxu0
        %v1439 = vpop.f32.mrb[0].mxu0
        %v1440 = vadd.f32 0.0, %v1439
        %v1441 = vpop.f32.mrb[0].mxu0
        %1442 = vmatprep.mubr.bf16.mxu0 0
        %1443 = vmatmul.mubr.bf16.gmra.mrb[0].mxu0 %v1349
        %v1444 = vpop.f32.mrb[0].mxu0
        %v1445 = vadd.f32 0.0, %v1444
        %v1446 = vpop.f32.mrb[0].mxu0
        %v1447 = vpop.f32.mrb[0].mxu0
        %v1448 = vadd.f32 0.0, %v1447
        %v1449 = vpop.f32.mrb[0].mxu0
        %1450 = vdwg.mxu0
        %v1451 = vadd.f32 %v1325, %v1389
        %v1452 = vadd.f32 %v1326, %v1392
        %v1453 = vadd.f32 %v1327, %v1397
        %v1454 = vadd.f32 %v1328, %v1400
        %v1455 = vadd.f32 %v1329, %v1405
        %v1456 = vadd.f32 %v1330, %v1408
        %v1457 = vadd.f32 %v1331, %v1413
        %v1458 = vadd.f32 %v1332, %v1416
        %v1459 = vadd.f32 %v1333, %v1421
        %v1460 = vadd.f32 %v1334, %v1424
        %v1461 = vadd.f32 %v1335, %v1429
        %v1462 = vadd.f32 %v1336, %v1432
        %v1463 = vadd.f32 %v1337, %v1437
        %v1464 = vadd.f32 %v1338, %v1440
        %v1465 = vadd.f32 %v1339, %v1445
        %v1466 = vadd.f32 %v1340, %v1448
        %vm1477 = vcmask 1042432
        %vm1478 = vcmask 1046532
        %vm1479 = vmor %vm1477, %vm1478
        %v1480 = vrot.slane %v371, 5
        %v1481 = vrot.slane %v1480, 4
        %v1482 = vrot.slane %v372, 5
        %v1483 = vsel %vm1479, %v1481, %v1482
        %v1484 = vrot.slane %v1482, 4
        %v1485 = vrot.slane %v373, 5
        %v1486 = vsel %vm1479, %v1484, %v1485
        %v1487 = vrot.slane %v374, 5
        %v1488 = vrot.slane %v1487, 4
        %v1489 = vrot.slane %v375, 5
        %v1490 = vsel %vm1479, %v1488, %v1489
        %v1491 = vrot.slane %v1489, 4
        %v1492 = vrot.slane %v376, 5
        %v1493 = vsel %vm1479, %v1491, %v1492
        %v1494 = vrot.slane %v377, 5
        %v1495 = vrot.slane %v1494, 4
        %v1496 = vrot.slane %v378, 5
        %v1497 = vsel %vm1479, %v1495, %v1496
        %v1498 = vrot.slane %v1496, 4
        %v1499 = vrot.slane %v379, 5
        %v1500 = vsel %vm1479, %v1498, %v1499
        %v1501 = vrot.slane %v380, 5
        %v1502 = vrot.slane %v1501, 4
        %v1503 = vrot.slane %v381, 5
        %v1504 = vsel %vm1479, %v1502, %v1503
        %v1505 = vrot.slane %v1503, 4
        %v1506 = vrot.slane %v382, 5
        %v1507 = vsel %vm1479, %v1505, %v1506
        %v1508 = vrot.slane %v383, 5
        %v1509 = vrot.slane %v1508, 4
        %v1510 = vrot.slane %v384, 5
        %v1511 = vsel %vm1479, %v1509, %v1510
        %v1512 = vrot.slane %v1510, 4
        %v1513 = vrot.slane %v385, 5
        %v1514 = vsel %vm1479, %v1512, %v1513
        %v1515 = vrot.slane %v386, 5
        %v1516 = vrot.slane %v1515, 4
        %v1517 = vrot.slane %v387, 5
        %v1518 = vsel %vm1479, %v1516, %v1517
        %v1519 = vrot.slane %v1517, 4
        %v1520 = vrot.slane %v388, 5
        %v1521 = vsel %vm1479, %v1519, %v1520
        %v1522 = vrot.slane %v389, 5
        %v1523 = vrot.slane %v1522, 4
        %v1524 = vrot.slane %v390, 5
        %v1525 = vsel %vm1479, %v1523, %v1524
        %v1526 = vrot.slane %v1524, 4
        %v1527 = vrot.slane %v391, 5
        %v1528 = vsel %vm1479, %v1526, %v1527
        %v1529 = vrot.slane %v392, 5
        %v1530 = vrot.slane %v1529, 4
        %v1531 = vrot.slane %v393, 5
        %v1532 = vsel %vm1479, %v1530, %v1531
        %v1533 = vrot.slane %v1531, 4
        %v1534 = vrot.slane %v394, 5
        %v1535 = vsel %vm1479, %v1533, %v1534
        %v1536 = vrot.slane %v395, 5
        %v1537 = vrot.slane %v1536, 4
        %v1538 = vrot.slane %v396, 5
        %v1539 = vsel %vm1479, %v1537, %v1538
        %v1540 = vrot.slane %v1538, 4
        %v1541 = vrot.slane %v397, 5
        %v1542 = vsel %vm1479, %v1540, %v1541
        %v1543 = vrot.slane %v398, 5
        %v1544 = vrot.slane %v1543, 4
        %v1545 = vrot.slane %v399, 5
        %v1546 = vsel %vm1479, %v1544, %v1545
        %v1547 = vrot.slane %v1545, 4
        %v1548 = vrot.slane %v400, 5
        %v1549 = vsel %vm1479, %v1547, %v1548
        %v1550 = vunpack.c.l.b16 %v1483
        %v1551 = vunpack.c.l.b16 %v1486
        %v1552 = vunpack.c.l.b16 %v1490
        %v1553 = vunpack.c.l.b16 %v1493
        %v1554 = vunpack.c.l.b16 %v1497
        %v1555 = vunpack.c.l.b16 %v1500
        %v1556 = vunpack.c.l.b16 %v1504
        %v1557 = vunpack.c.l.b16 %v1507
        %v1558 = vunpack.c.l.b16 %v1511
        %v1559 = vunpack.c.l.b16 %v1514
        %v1560 = vunpack.c.l.b16 %v1518
        %v1561 = vunpack.c.l.b16 %v1521
        %v1562 = vunpack.c.l.b16 %v1525
        %v1563 = vunpack.c.l.b16 %v1528
        %v1564 = vunpack.c.l.b16 %v1532
        %v1565 = vunpack.c.l.b16 %v1535
        %v1566 = vpack.c.b16 %v1551, %v1550
        %v1567 = vpack.c.b16 %v1553, %v1552
        %v1568 = vpack.c.b16 %v1555, %v1554
        %v1569 = vpack.c.b16 %v1557, %v1556
        %v1570 = vpack.c.b16 %v1559, %v1558
        %v1571 = vpack.c.b16 %v1561, %v1560
        %v1572 = vpack.c.b16 %v1563, %v1562
        %v1573 = vpack.c.b16 %v1565, %v1564
        %v1575 = vsel %vm450, %v1566, 0
        %v1578 = vsel %vm450, %v1567, 0
        %v1581 = vsel %vm450, %v1568, 0
        %v1584 = vsel %vm450, %v1569, 0
        %v1587 = vsel %vm450, %v1570, 0
        %v1590 = vsel %vm450, %v1571, 0
        %v1593 = vsel %vm450, %v1572, 0
        %v1596 = vsel %vm450, %v1573, 0
        %v1599 = vsel %vm475, %v402, 0
        %1601 = vmatprep.subr.bf16.mxu0 0
        %1602 = vmatpush1.bf16.msra.mxu0 %v1599
        %1603 = vmatprep.subr.bf16.mxu0 0
        %1604 = vmatpush1.bf16.msra.mxu0 0
        %1605 = vmatprep.subr.bf16.mxu0 0
        %1606 = vmatpush1.bf16.msra.mxu0 0
        %1607 = vmatprep.subr.bf16.mxu0 0
        %1608 = vmatpush1.bf16.msra.mxu0 0
        %1609 = vmatprep.subr.bf16.mxu0 0
        %1610 = vmatpush1.bf16.msra.mxu0 0
        %1611 = vmatprep.subr.bf16.mxu0 0
        %1612 = vmatpush1.bf16.msra.mxu0 0
        %1613 = vmatprep.subr.bf16.mxu0 0
        %1614 = vmatpush1.bf16.msra.mxu0 0
        %1615 = vmatprep.subr.bf16.mxu0 0
        %1616 = vmatpush1.bf16.msra.mxu0 0
        %1617 = vmatprep.subr.bf16.mxu0 0
        %1618 = vmatpush1.bf16.msra.mxu0 0
        %1619 = vmatprep.subr.bf16.mxu0 0
        %1620 = vmatpush1.bf16.msra.mxu0 0
        %1621 = vmatprep.subr.bf16.mxu0 0
        %1622 = vmatpush1.bf16.msra.mxu0 0
        %1623 = vmatprep.subr.bf16.mxu0 0
        %1624 = vmatpush1.bf16.msra.mxu0 0
        %1625 = vmatprep.subr.bf16.mxu0 0
        %1626 = vmatpush1.bf16.msra.mxu0 0
        %1627 = vmatprep.subr.bf16.mxu0 0
        %1628 = vmatpush1.bf16.msra.mxu0 0
        %1629 = vmatprep.subr.bf16.mxu0 0
        %1630 = vmatpush1.bf16.msra.mxu0 0
        %1631 = vmatprep.subr.bf16.mxu0 0
        %1632 = vmatpush1.bf16.msra.mxu0 0
        %1633 = vmatprep.mubr.bf16.mxu0 0
        %1634 = vmatmul.mubr.bf16.gmra.mrb[0].mxu0 %v1575
        %v1635 = vpop.f32.mrb[0].mxu0
        %v1636 = vadd.f32 0.0, %v1635
        %v1637 = vpop.f32.mrb[0].mxu0
        %v1638 = vpop.f32.mrb[0].mxu0
        %v1639 = vadd.f32 0.0, %v1638
        %v1640 = vpop.f32.mrb[0].mxu0
        %1641 = vmatprep.mubr.bf16.mxu0 0
        %1642 = vmatmul.mubr.bf16.gmra.mrb[0].mxu0 %v1578
        %v1643 = vpop.f32.mrb[0].mxu0
        %v1644 = vadd.f32 0.0, %v1643
        %v1645 = vpop.f32.mrb[0].mxu0
        %v1646 = vpop.f32.mrb[0].mxu0
        %v1647 = vadd.f32 0.0, %v1646
        %v1648 = vpop.f32.mrb[0].mxu0
        %1649 = vmatprep.mubr.bf16.mxu0 0
        %1650 = vmatmul.mubr.bf16.gmra.mrb[0].mxu0 %v1581
        %v1651 = vpop.f32.mrb[0].mxu0
        %v1652 = vadd.f32 0.0, %v1651
        %v1653 = vpop.f32.mrb[0].mxu0
        %v1654 = vpop.f32.mrb[0].mxu0
        %v1655 = vadd.f32 0.0, %v1654
        %v1656 = vpop.f32.mrb[0].mxu0
        %1657 = vmatprep.mubr.bf16.mxu0 0
        %1658 = vmatmul.mubr.bf16.gmra.mrb[0].mxu0 %v1584
        %v1659 = vpop.f32.mrb[0].mxu0
        %v1660 = vadd.f32 0.0, %v1659
        %v1661 = vpop.f32.mrb[0].mxu0
        %v1662 = vpop.f32.mrb[0].mxu0
        %v1663 = vadd.f32 0.0, %v1662
        %v1664 = vpop.f32.mrb[0].mxu0
        %1665 = vmatprep.mubr.bf16.mxu0 0
        %1666 = vmatmul.mubr.bf16.gmra.mrb[0].mxu0 %v1587
        %v1667 = vpop.f32.mrb[0].mxu0
        %v1668 = vadd.f32 0.0, %v1667
        %v1669 = vpop.f32.mrb[0].mxu0
        %v1670 = vpop.f32.mrb[0].mxu0
        %v1671 = vadd.f32 0.0, %v1670
        %v1672 = vpop.f32.mrb[0].mxu0
        %1673 = vmatprep.mubr.bf16.mxu0 0
        %1674 = vmatmul.mubr.bf16.gmra.mrb[0].mxu0 %v1590
        %v1675 = vpop.f32.mrb[0].mxu0
        %v1676 = vadd.f32 0.0, %v1675
        %v1677 = vpop.f32.mrb[0].mxu0
        %v1678 = vpop.f32.mrb[0].mxu0
        %v1679 = vadd.f32 0.0, %v1678
        %v1680 = vpop.f32.mrb[0].mxu0
        %1681 = vmatprep.mubr.bf16.mxu0 0
        %1682 = vmatmul.mubr.bf16.gmra.mrb[0].mxu0 %v1593
        %v1683 = vpop.f32.mrb[0].mxu0
        %v1684 = vadd.f32 0.0, %v1683
        %v1685 = vpop.f32.mrb[0].mxu0
        %v1686 = vpop.f32.mrb[0].mxu0
        %v1687 = vadd.f32 0.0, %v1686
        %v1688 = vpop.f32.mrb[0].mxu0
        %1689 = vmatprep.mubr.bf16.mxu0 0
        %1690 = vmatmul.mubr.bf16.gmra.mrb[0].mxu0 %v1596
        %v1691 = vpop.f32.mrb[0].mxu0
        %v1692 = vadd.f32 0.0, %v1691
        %v1693 = vpop.f32.mrb[0].mxu0
        %v1694 = vpop.f32.mrb[0].mxu0
        %v1695 = vadd.f32 0.0, %v1694
        %v1696 = vpop.f32.mrb[0].mxu0
        %1697 = vdwg.mxu0
        %v1698 = vadd.f32 %v1451, %v1636
        %v1699 = vadd.f32 %v1452, %v1639
        %v1700 = vadd.f32 %v1453, %v1644
        %v1701 = vadd.f32 %v1454, %v1647
        %v1702 = vadd.f32 %v1455, %v1652
        %v1703 = vadd.f32 %v1456, %v1655
        %v1704 = vadd.f32 %v1457, %v1660
        %v1705 = vadd.f32 %v1458, %v1663
        %v1706 = vadd.f32 %v1459, %v1668
        %v1707 = vadd.f32 %v1460, %v1671
        %v1708 = vadd.f32 %v1461, %v1676
        %v1709 = vadd.f32 %v1462, %v1679
        %v1710 = vadd.f32 %v1463, %v1684
        %v1711 = vadd.f32 %v1464, %v1687
        %v1712 = vadd.f32 %v1465, %v1692
        %v1713 = vadd.f32 %v1466, %v1695
        %v1714 = vunpack.c.l.b16 %v1539
        %v1715 = vunpack.c.l.b16 %v1542
        %v1716 = vpack.c.b16 %v1715, %v1714
        %v1718 = vunpack.c.l.b16 %v403
        %v1719 = vpack.c.b16 %v1718, %v1718
        %v1720 = vrot.slane %v1719, 2
        %v1722 = vsel %vm450, %v1716, 0
        %v1725 = vsel %vm475, %v1720, 0
        %1727 = vmatprep.subr.bf16.mxu0 0
        %1728 = vmatpush1.bf16.msra.mxu0 %v1725
        %1729 = vmatprep.subr.bf16.mxu0 0
        %1730 = vmatpush1.bf16.msra.mxu0 0
        %1731 = vmatprep.subr.bf16.mxu0 0
        %1732 = vmatpush1.bf16.msra.mxu0 0
        %1733 = vmatprep.subr.bf16.mxu0 0
        %1734 = vmatpush1.bf16.msra.mxu0 0
        %1735 = vmatprep.subr.bf16.mxu0 0
        %1736 = vmatpush1.bf16.msra.mxu0 0
        %1737 = vmatprep.subr.bf16.mxu0 0
        %1738 = vmatpush1.bf16.msra.mxu0 0
        %1739 = vmatprep.subr.bf16.mxu0 0
        %1740 = vmatpush1.bf16.msra.mxu0 0
        %1741 = vmatprep.subr.bf16.mxu0 0
        %1742 = vmatpush1.bf16.msra.mxu0 0
        %1743 = vmatprep.subr.bf16.mxu0 0
        %1744 = vmatpush1.bf16.msra.mxu0 0
        %1745 = vmatprep.subr.bf16.mxu0 0
        %1746 = vmatpush1.bf16.msra.mxu0 0
        %1747 = vmatprep.subr.bf16.mxu0 0
        %1748 = vmatpush1.bf16.msra.mxu0 0
        %1749 = vmatprep.subr.bf16.mxu0 0
        %1750 = vmatpush1.bf16.msra.mxu0 0
        %1751 = vmatprep.subr.bf16.mxu0 0
        %1752 = vmatpush1.bf16.msra.mxu0 0
        %1753 = vmatprep.subr.bf16.mxu0 0
        %1754 = vmatpush1.bf16.msra.mxu0 0
        %1755 = vmatprep.subr.bf16.mxu0 0
        %1756 = vmatpush1.bf16.msra.mxu0 0
        %1757 = vmatprep.subr.bf16.mxu0 0
        %1758 = vmatpush1.bf16.msra.mxu0 0
        %1759 = vmatprep.mubr.bf16.mxu0 0
        %1760 = vmatmul.mubr.bf16.gmra.mrb[0].mxu0 %v1578
        %v1761 = vpop.f32.mrb[0].mxu0
        %v1762 = vadd.f32 0.0, %v1761
        %v1763 = vpop.f32.mrb[0].mxu0
        %v1764 = vpop.f32.mrb[0].mxu0
        %v1765 = vadd.f32 0.0, %v1764
        %v1766 = vpop.f32.mrb[0].mxu0
        %1767 = vmatprep.mubr.bf16.mxu0 0
        %1768 = vmatmul.mubr.bf16.gmra.mrb[0].mxu0 %v1581
        %v1769 = vpop.f32.mrb[0].mxu0
        %v1770 = vadd.f32 0.0, %v1769
        %v1771 = vpop.f32.mrb[0].mxu0
        %v1772 = vpop.f32.mrb[0].mxu0
        %v1773 = vadd.f32 0.0, %v1772
        %v1774 = vpop.f32.mrb[0].mxu0
        %1775 = vmatprep.mubr.bf16.mxu0 0
        %1776 = vmatmul.mubr.bf16.gmra.mrb[0].mxu0 %v1584
        %v1777 = vpop.f32.mrb[0].mxu0
        %v1778 = vadd.f32 0.0, %v1777
        %v1779 = vpop.f32.mrb[0].mxu0
        %v1780 = vpop.f32.mrb[0].mxu0
        %v1781 = vadd.f32 0.0, %v1780
        %v1782 = vpop.f32.mrb[0].mxu0
        %1783 = vmatprep.mubr.bf16.mxu0 0
        %1784 = vmatmul.mubr.bf16.gmra.mrb[0].mxu0 %v1587
        %v1785 = vpop.f32.mrb[0].mxu0
        %v1786 = vadd.f32 0.0, %v1785
        %v1787 = vpop.f32.mrb[0].mxu0
        %v1788 = vpop.f32.mrb[0].mxu0
        %v1789 = vadd.f32 0.0, %v1788
        %v1790 = vpop.f32.mrb[0].mxu0
        %1791 = vmatprep.mubr.bf16.mxu0 0
        %1792 = vmatmul.mubr.bf16.gmra.mrb[0].mxu0 %v1590
        %v1793 = vpop.f32.mrb[0].mxu0
        %v1794 = vadd.f32 0.0, %v1793
        %v1795 = vpop.f32.mrb[0].mxu0
        %v1796 = vpop.f32.mrb[0].mxu0
        %v1797 = vadd.f32 0.0, %v1796
        %v1798 = vpop.f32.mrb[0].mxu0
        %1799 = vmatprep.mubr.bf16.mxu0 0
        %1800 = vmatmul.mubr.bf16.gmra.mrb[0].mxu0 %v1593
        %v1801 = vpop.f32.mrb[0].mxu0
        %v1802 = vadd.f32 0.0, %v1801
        %v1803 = vpop.f32.mrb[0].mxu0
        %v1804 = vpop.f32.mrb[0].mxu0
        %v1805 = vadd.f32 0.0, %v1804
        %v1806 = vpop.f32.mrb[0].mxu0
        %1807 = vmatprep.mubr.bf16.mxu0 0
        %1808 = vmatmul.mubr.bf16.gmra.mrb[0].mxu0 %v1596
        %v1809 = vpop.f32.mrb[0].mxu0
        %v1810 = vadd.f32 0.0, %v1809
        %v1811 = vpop.f32.mrb[0].mxu0
        %v1812 = vpop.f32.mrb[0].mxu0
        %v1813 = vadd.f32 0.0, %v1812
        %v1814 = vpop.f32.mrb[0].mxu0
        %1815 = vmatprep.mubr.bf16.mxu0 0
        %1816 = vmatmul.mubr.bf16.gmra.mrb[0].mxu0 %v1722
        %v1817 = vpop.f32.mrb[0].mxu0
        %v1818 = vadd.f32 0.0, %v1817
        %v1819 = vpop.f32.mrb[0].mxu0
        %v1820 = vpop.f32.mrb[0].mxu0
        %v1821 = vadd.f32 0.0, %v1820
        %v1822 = vpop.f32.mrb[0].mxu0
        %1823 = vdwg.mxu0
        %v1824 = vadd.f32 %v1698, %v1762
        %v1825 = vadd.f32 %v1699, %v1765
        %v1826 = vadd.f32 %v1700, %v1770
        %v1827 = vadd.f32 %v1701, %v1773
        %v1828 = vadd.f32 %v1702, %v1778
        %v1829 = vadd.f32 %v1703, %v1781
        %v1830 = vadd.f32 %v1704, %v1786
        %v1831 = vadd.f32 %v1705, %v1789
        %v1832 = vadd.f32 %v1706, %v1794
        %v1833 = vadd.f32 %v1707, %v1797
        %v1834 = vadd.f32 %v1708, %v1802
        %v1835 = vadd.f32 %v1709, %v1805
        %v1836 = vadd.f32 %v1710, %v1810
        %v1837 = vadd.f32 %v1711, %v1813
        %v1838 = vadd.f32 %v1712, %v1818
        %v1839 = vadd.f32 %v1713, %v1821
        %v1840 = vunpack.c.l.b16 %v1546
        %v1841 = vunpack.c.l.b16 %v1549
        %v1842 = vpack.c.b16 %v1841, %v1840
        %v1844 = vsel %vm450, %v1842, 0
        %v1847 = vsel %vm475, %v405, 0
        %1849 = vmatprep.subr.bf16.mxu0 0
        %1850 = vmatpush1.bf16.msra.mxu0 %v1847
        %1851 = vmatprep.subr.bf16.mxu0 0
        %1852 = vmatpush1.bf16.msra.mxu0 0
        %1853 = vmatprep.subr.bf16.mxu0 0
        %1854 = vmatpush1.bf16.msra.mxu0 0
        %1855 = vmatprep.subr.bf16.mxu0 0
        %1856 = vmatpush1.bf16.msra.mxu0 0
        %1857 = vmatprep.subr.bf16.mxu0 0
        %1858 = vmatpush1.bf16.msra.mxu0 0
        %1859 = vmatprep.subr.bf16.mxu0 0
        %1860 = vmatpush1.bf16.msra.mxu0 0
        %1861 = vmatprep.subr.bf16.mxu0 0
        %1862 = vmatpush1.bf16.msra.mxu0 0
        %1863 = vmatprep.subr.bf16.mxu0 0
        %1864 = vmatpush1.bf16.msra.mxu0 0
        %1865 = vmatprep.subr.bf16.mxu0 0
        %1866 = vmatpush1.bf16.msra.mxu0 0
        %1867 = vmatprep.subr.bf16.mxu0 0
        %1868 = vmatpush1.bf16.msra.mxu0 0
        %1869 = vmatprep.subr.bf16.mxu0 0
        %1870 = vmatpush1.bf16.msra.mxu0 0
        %1871 = vmatprep.subr.bf16.mxu0 0
        %1872 = vmatpush1.bf16.msra.mxu0 0
        %1873 = vmatprep.subr.bf16.mxu0 0
        %1874 = vmatpush1.bf16.msra.mxu0 0
        %1875 = vmatprep.subr.bf16.mxu0 0
        %1876 = vmatpush1.bf16.msra.mxu0 0
        %1877 = vmatprep.subr.bf16.mxu0 0
        %1878 = vmatpush1.bf16.msra.mxu0 0
        %1879 = vmatprep.subr.bf16.mxu0 0
        %1880 = vmatpush1.bf16.msra.mxu0 0
        %1881 = vmatprep.mubr.bf16.mxu0 0
        %1882 = vmatmul.mubr.bf16.gmra.mrb[0].mxu0 %v1581
        %v1883 = vpop.f32.mrb[0].mxu0
        %v1884 = vadd.f32 0.0, %v1883
        %v1885 = vpop.f32.mrb[0].mxu0
        %v1886 = vpop.f32.mrb[0].mxu0
        %v1887 = vadd.f32 0.0, %v1886
        %v1888 = vpop.f32.mrb[0].mxu0
        %1889 = vmatprep.mubr.bf16.mxu0 0
        %1890 = vmatmul.mubr.bf16.gmra.mrb[0].mxu0 %v1584
        %v1891 = vpop.f32.mrb[0].mxu0
        %v1892 = vadd.f32 0.0, %v1891
        %v1893 = vpop.f32.mrb[0].mxu0
        %v1894 = vpop.f32.mrb[0].mxu0
        %v1895 = vadd.f32 0.0, %v1894
        %v1896 = vpop.f32.mrb[0].mxu0
        %1897 = vmatprep.mubr.bf16.mxu0 0
        %1898 = vmatmul.mubr.bf16.gmra.mrb[0].mxu0 %v1587
        %v1899 = vpop.f32.mrb[0].mxu0
        %v1900 = vadd.f32 0.0, %v1899
        %v1901 = vpop.f32.mrb[0].mxu0
        %v1902 = vpop.f32.mrb[0].mxu0
        %v1903 = vadd.f32 0.0, %v1902
        %v1904 = vpop.f32.mrb[0].mxu0
        %1905 = vmatprep.mubr.bf16.mxu0 0
        %1906 = vmatmul.mubr.bf16.gmra.mrb[0].mxu0 %v1590
        %v1907 = vpop.f32.mrb[0].mxu0
        %v1908 = vadd.f32 0.0, %v1907
        %v1909 = vpop.f32.mrb[0].mxu0
        %v1910 = vpop.f32.mrb[0].mxu0
        %v1911 = vadd.f32 0.0, %v1910
        %v1912 = vpop.f32.mrb[0].mxu0
        %1913 = vmatprep.mubr.bf16.mxu0 0
        %1914 = vmatmul.mubr.bf16.gmra.mrb[0].mxu0 %v1593
        %v1915 = vpop.f32.mrb[0].mxu0
        %v1916 = vadd.f32 0.0, %v1915
        %v1917 = vpop.f32.mrb[0].mxu0
        %v1918 = vpop.f32.mrb[0].mxu0
        %v1919 = vadd.f32 0.0, %v1918
        %v1920 = vpop.f32.mrb[0].mxu0
        %1921 = vmatprep.mubr.bf16.mxu0 0
        %1922 = vmatmul.mubr.bf16.gmra.mrb[0].mxu0 %v1596
        %v1923 = vpop.f32.mrb[0].mxu0
        %v1924 = vadd.f32 0.0, %v1923
        %v1925 = vpop.f32.mrb[0].mxu0
        %v1926 = vpop.f32.mrb[0].mxu0
        %v1927 = vadd.f32 0.0, %v1926
        %v1928 = vpop.f32.mrb[0].mxu0
        %1929 = vmatprep.mubr.bf16.mxu0 0
        %1930 = vmatmul.mubr.bf16.gmra.mrb[0].mxu0 %v1722
        %v1931 = vpop.f32.mrb[0].mxu0
        %v1932 = vadd.f32 0.0, %v1931
        %v1933 = vpop.f32.mrb[0].mxu0
        %v1934 = vpop.f32.mrb[0].mxu0
        %v1935 = vadd.f32 0.0, %v1934
        %v1936 = vpop.f32.mrb[0].mxu0
        %1937 = vmatprep.mubr.bf16.mxu0 0
        %1938 = vmatmul.mubr.bf16.gmra.mrb[0].mxu0 %v1844
        %v1939 = vpop.f32.mrb[0].mxu0
        %v1940 = vadd.f32 0.0, %v1939
        %v1941 = vpop.f32.mrb[0].mxu0
        %v1942 = vpop.f32.mrb[0].mxu0
        %v1943 = vadd.f32 0.0, %v1942
        %v1944 = vpop.f32.mrb[0].mxu0
        %1945 = vdwg.mxu0
        %v1946 = vadd.f32 %v1824, %v1884
        %v1947 = vadd.f32 %v1825, %v1887
        %v1948 = vadd.f32 %v1826, %v1892
        %v1949 = vadd.f32 %v1827, %v1895
        %v1950 = vadd.f32 %v1828, %v1900
        %v1951 = vadd.f32 %v1829, %v1903
        %v1952 = vadd.f32 %v1830, %v1908
        %v1953 = vadd.f32 %v1831, %v1911
        %v1954 = vadd.f32 %v1832, %v1916
        %v1955 = vadd.f32 %v1833, %v1919
        %v1956 = vadd.f32 %v1834, %v1924
        %v1957 = vadd.f32 %v1835, %v1927
        %v1958 = vadd.f32 %v1836, %v1932
        %v1959 = vadd.f32 %v1837, %v1935
        %v1960 = vadd.f32 %v1838, %v1940
        %v1961 = vadd.f32 %v1839, %v1943
        %v1962 = vpack.c.bf16 %v1947, %v1946
        %v1963 = vpack.c.bf16 %v1949, %v1948
        %v1964 = vpack.c.bf16 %v1951, %v1950
        %v1965 = vpack.c.bf16 %v1953, %v1952
        %v1966 = vpack.c.bf16 %v1955, %v1954
        %v1967 = vpack.c.bf16 %v1957, %v1956
        %v1968 = vpack.c.bf16 %v1959, %v1958
        %v1969 = vpack.c.bf16 %v1961, %v1960
        %v1978 = vunpack.c.l.b16 %v1962
        %v1979 = vunpack.c.h.b16 %v1962
        %v1980 = vunpack.c.l.b16 %v1963
        %v1981 = vunpack.c.h.b16 %v1963
        %v1982 = vunpack.c.l.b16 %v1964
        %v1983 = vunpack.c.h.b16 %v1964
        %v1984 = vunpack.c.l.b16 %v1965
        %v1985 = vunpack.c.h.b16 %v1965
        %v1986 = vunpack.c.l.b16 %v1966
        %v1987 = vunpack.c.h.b16 %v1966
        %v1988 = vunpack.c.l.b16 %v1967
        %v1989 = vunpack.c.h.b16 %v1967
        %v1990 = vunpack.c.l.b16 %v1968
        %v1991 = vunpack.c.h.b16 %v1968
        %v1992 = vunpack.c.l.b16 %v1969
        %v1993 = vunpack.c.h.b16 %v1969
        %v1994 = vpack.c.b16 %v1978, %v1978
        %v1995 = vpack.c.b16 %v1979, %v1979
        %v1996 = vpack.c.b16 %v1980, %v1980
        %v1997 = vpack.c.b16 %v1981, %v1981
        %v1998 = vpack.c.b16 %v1982, %v1982
        %v1999 = vpack.c.b16 %v1983, %v1983
        %v2000 = vpack.c.b16 %v1984, %v1984
        %v2001 = vpack.c.b16 %v1985, %v1985
        %v2002 = vpack.c.b16 %v1986, %v1986
        %v2003 = vpack.c.b16 %v1987, %v1987
        %v2004 = vpack.c.b16 %v1988, %v1988
        %v2005 = vpack.c.b16 %v1989, %v1989
        %v2006 = vpack.c.b16 %v1990, %v1990
        %v2007 = vpack.c.b16 %v1991, %v1991
        %v2008 = vpack.c.b16 %v1992, %v1992
        %v2009 = vpack.c.b16 %v1993, %v1993
        %vm2026 = vcmask 60416
        %2027 = vst.msk [vmem:[%s368] sm:$0xf] %vm2026, %v1994
        %2028 = vst.msk [vmem:[%s368 + $0x4] sm:$0xf] %vm2026, %v1995
        %2029 = vst.msk [vmem:[%s368 + $0x8] sm:$0xf] %vm2026, %v1996
        %2030 = vst.msk [vmem:[%s368 + $0xc] sm:$0xf] %vm2026, %v1997
        %2031 = vst.msk [vmem:[%s368 + $0x10] sm:$0xf] %vm2026, %v1998
        %2032 = vst.msk [vmem:[%s368 + $0x14] sm:$0xf] %vm2026, %v1999
        %2033 = vst.msk [vmem:[%s368 + $0x18] sm:$0xf] %vm2026, %v2000
        %2034 = vst.msk [vmem:[%s368 + $0x1c] sm:$0xf] %vm2026, %v2001
        %2035 = vst.msk [vmem:[%s368 + $0x20] sm:$0xf] %vm2026, %v2002
        %2036 = vst.msk [vmem:[%s368 + $0x24] sm:$0xf] %vm2026, %v2003
        %2037 = vst.msk [vmem:[%s368 + $0x28] sm:$0xf] %vm2026, %v2004
        %2038 = vst.msk [vmem:[%s368 + $0x2c] sm:$0xf] %vm2026, %v2005
        %2039 = vst.msk [vmem:[%s368 + $0x30] sm:$0xf] %vm2026, %v2006
        %2040 = vst.msk [vmem:[%s368 + $0x34] sm:$0xf] %vm2026, %v2007
        %2041 = vst.msk [vmem:[%s368 + $0x38] sm:$0xf] %vm2026, %v2008
        %2042 = vst.msk [vmem:[%s368 + $0x3c] sm:$0xf] %vm2026, %v2009
        %vm2043 = vcmask 64512
        %v2044 = vsel %vm2043, %v1946, 0.0
        %v2045 = vsel %vm2043, %v1947, 0.0
        %v2046 = vadd.f32 %v2044, %v2045
        %v2047 = vsel %vm2043, %v1948, 0.0
        %v2048 = vadd.f32 %v2046, %v2047
        %v2049 = vsel %vm2043, %v1949, 0.0
        %v2050 = vadd.f32 %v2048, %v2049
        %v2051 = vsel %vm2043, %v1950, 0.0
        %v2052 = vadd.f32 %v2050, %v2051
        %v2053 = vsel %vm2043, %v1951, 0.0
        %v2054 = vadd.f32 %v2052, %v2053
        %v2055 = vsel %vm2043, %v1952, 0.0
        %v2056 = vadd.f32 %v2054, %v2055
        %v2057 = vsel %vm2043, %v1953, 0.0
        %v2058 = vadd.f32 %v2056, %v2057
        %v2059 = vsel %vm2043, %v1954, 0.0
        %v2060 = vadd.f32 %v2058, %v2059
        %v2061 = vsel %vm2043, %v1955, 0.0
        %v2062 = vadd.f32 %v2060, %v2061
        %v2063 = vsel %vm2043, %v1956, 0.0
        %v2064 = vadd.f32 %v2062, %v2063
        %v2065 = vsel %vm2043, %v1957, 0.0
        %v2066 = vadd.f32 %v2064, %v2065
        %v2067 = vsel %vm2043, %v1958, 0.0
        %v2068 = vadd.f32 %v2066, %v2067
        %v2069 = vsel %vm2043, %v1959, 0.0
        %v2070 = vadd.f32 %v2068, %v2069
        %v2071 = vsel %vm2043, %v1960, 0.0
        %v2072 = vadd.f32 %v2070, %v2071
        %v2073 = vsel %vm2043, %v1961, 0.0
        %v2074 = vadd.f32 %v2072, %v2073
        %v2075 = vrot.slane %v2074, 4
        %v2076 = vadd.f32 %v2074, %v2075
        %v2077 = vrot.slane %v2076, 2
        %v2078 = vadd.f32 %v2076, %v2077
        %v2079 = vrot.slane %v2078, 1
        %v2080 = vadd.f32 %v2078, %v2079
        %vm2081 = vcmask 57344
        %2082 = vst.msk [vmem:[%s316] sm:$0x1] %vm2081, %v2080
        %v2083 = vmul.f32 %v1946, %v1946
        %v2084 = vmul.f32 %v1947, %v1947
        %v2085 = vmul.f32 %v1948, %v1948
        %v2086 = vmul.f32 %v1949, %v1949
        %v2087 = vmul.f32 %v1950, %v1950
        %v2088 = vmul.f32 %v1951, %v1951
        %v2089 = vmul.f32 %v1952, %v1952
        %v2090 = vmul.f32 %v1953, %v1953
        %v2091 = vmul.f32 %v1954, %v1954
        %v2092 = vmul.f32 %v1955, %v1955
        %v2093 = vmul.f32 %v1956, %v1956
        %v2094 = vmul.f32 %v1957, %v1957
        %v2095 = vmul.f32 %v1958, %v1958
        %v2096 = vmul.f32 %v1959, %v1959
        %v2097 = vmul.f32 %v1960, %v1960
        %v2098 = vmul.f32 %v1961, %v1961
        %v2099 = vsel %vm2043, %v2083, 0.0
        %v2100 = vsel %vm2043, %v2084, 0.0
        %v2101 = vadd.f32 %v2099, %v2100
        %v2102 = vsel %vm2043, %v2085, 0.0
        %v2103 = vadd.f32 %v2101, %v2102
        %v2104 = vsel %vm2043, %v2086, 0.0
        %v2105 = vadd.f32 %v2103, %v2104
        %v2106 = vsel %vm2043, %v2087, 0.0
        %v2107 = vadd.f32 %v2105, %v2106
        %v2108 = vsel %vm2043, %v2088, 0.0
        %v2109 = vadd.f32 %v2107, %v2108
        %v2110 = vsel %vm2043, %v2089, 0.0
        %v2111 = vadd.f32 %v2109, %v2110
        %v2112 = vsel %vm2043, %v2090, 0.0
        %v2113 = vadd.f32 %v2111, %v2112
        %v2114 = vsel %vm2043, %v2091, 0.0
        %v2115 = vadd.f32 %v2113, %v2114
        %v2116 = vsel %vm2043, %v2092, 0.0
        %v2117 = vadd.f32 %v2115, %v2116
        %v2118 = vsel %vm2043, %v2093, 0.0
        %v2119 = vadd.f32 %v2117, %v2118
        %v2120 = vsel %vm2043, %v2094, 0.0
        %v2121 = vadd.f32 %v2119, %v2120
        %v2122 = vsel %vm2043, %v2095, 0.0
        %v2123 = vadd.f32 %v2121, %v2122
        %v2124 = vsel %vm2043, %v2096, 0.0
        %v2125 = vadd.f32 %v2123, %v2124
        %v2126 = vsel %vm2043, %v2097, 0.0
        %v2127 = vadd.f32 %v2125, %v2126
        %v2128 = vsel %vm2043, %v2098, 0.0
        %v2129 = vadd.f32 %v2127, %v2128
        %v2130 = vrot.slane %v2129, 4
        %v2131 = vadd.f32 %v2129, %v2130
        %v2132 = vrot.slane %v2131, 2
        %v2133 = vadd.f32 %v2131, %v2132
        %v2134 = vrot.slane %v2133, 1
        %v2135 = vadd.f32 %v2133, %v2134
        %2136 = vst.msk [vmem:[%s322] sm:$0x1] %vm2081, %v2135
        %s2137 = smul.u32 8, %s28
        %p2138 = scmp.lt.s32.totalorder %s27, 1
        %s2139 = scalar_select %p2138, %s27, 1
        %p2140 = scmp.lt.s32.totalorder %s2137, 15
        %s2141 = scalar_select %p2140, %s2137, 15
        %s2142 = smul.addr %s2141, 2
        %s2143 = smul.addr %s2139, 32
        %s2144 = sadd.s32 %s2142, %s2143
        %s2145 = smul.addr %s2144, 4
        %s2146 = scalar_lea.vmem %s3, %s2145
        %s2147 = sand.u32 %s154, 1
        %s2148 = scalar_lea.sflag [#allocation3], %s2147
        %s2149 = sand.u32 %s154, 1
        %s2150 = scalar_lea.vmem [#allocation2], %s2149
        %s2151 = sand.u32 %s182, 1
        %s2152 = scalar_lea.sflag [#allocation5], %s2151
        %s2153 = sand.u32 %s182, 1
        %s2154 = scalar_lea.vmem [#allocation4], %s2153
        // Predicated region
        $region33: #{tpu_custom_call.1} parent=31 // pred_check
          %p2155 = pneg %p136
        $region34: #{tpu_custom_call.1} parent=31 // pred_check_branch
          %2157 = sbr.rel (%p2155) target = $region36
        $region35: #{tpu_custom_call.1} parent=31 // pred_region
          %s2158 = smul.u32 8, %s28
        $region36: #{tpu_custom_call.1} parent=31 // pred_fallthru
          _
        // Predicated region
        $region37: #{tpu_custom_call.1} parent=31 // pred_check
          %p2159 = pneg %p164
        $region38: #{tpu_custom_call.1} parent=31 // pred_check_branch
          %2161 = sbr.rel (%p2159) target = $region40
        $region39: #{tpu_custom_call.1} parent=31 // pred_region
          %s2163 = ssub.s32 16, 16
          %2164 = vsyncadd %s2148, %s2163
          %s2165 = smul.addr %s27, 2
          %s2166 = sadd.s32 %s28, %s2165
          %s2167 = smul.addr %s2166, 16
          %s2168 = scalar_lea.hbm %s4, %s2167
          %s2170 = sshll.u32 %s2150, 4
          %s2171 = int_to_ptr.vmem [resolvable:$true] %s2170
          %2173 = dma.vmem_to_hbm [thread:$0]  %s2171, 16, %s2168, %s2148
        $region40: #{tpu_custom_call.1} parent=31 // pred_fallthru
          _
        // Predicated region
        $region41: #{tpu_custom_call.1} parent=31 // pred_check
          %p2174 = pneg %p192
        $region42: #{tpu_custom_call.1} parent=31 // pred_check_branch
          %2176 = sbr.rel (%p2174) target = $region44
        $region43: #{tpu_custom_call.1} parent=31 // pred_region
          %s2178 = ssub.s32 16, 16
          %2179 = vsyncadd %s2152, %s2178
          %s2180 = smul.addr %s27, 2
          %s2181 = sadd.s32 %s28, %s2180
          %s2182 = smul.addr %s2181, 16
          %s2183 = scalar_lea.hbm %s5, %s2182
          %s2185 = sshll.u32 %s2154, 4
          %s2186 = int_to_ptr.vmem [resolvable:$true] %s2185
          %2188 = dma.vmem_to_hbm [thread:$0]  %s2186, 16, %s2183, %s2152
        $region44: #{tpu_custom_call.1} parent=31 // pred_fallthru
          _
      $region32: #{tpu_custom_call.1} parent=5 // pred_fallthru
        _
      %p2189 = scmp.le.s32.totalorder 2, %s18
      // Predicated region
      $region45: #{tpu_custom_call.1} parent=5 // pred_check
        %p2190 = pneg %p2189
      $region46: #{tpu_custom_call.1} parent=5 // pred_check_branch
        %2192 = sbr.rel (%p2190) target = $region48
      $region47: #{tpu_custom_call.1} parent=5 // pred_region
        %s2193 = ssub.s32 %s18, 2
        // Predicated region
        $region49: #{tpu_custom_call.1} parent=47 // pred_check
          %p2194 = pneg %p142
        $region50: #{tpu_custom_call.1} parent=47 // pred_check_branch
          %2196 = sbr.rel (%p2194) target = $region52
        $region51: #{tpu_custom_call.1} parent=47 // pred_region
          %s2197 = smul.u32 8, %s30
          %p2198 = scmp.lt.s32.totalorder %s29, 1
          %s2199 = scalar_select %p2198, %s29, 1
          %p2200 = scmp.lt.s32.totalorder %s2197, 15
          %s2201 = scalar_select %p2200, %s2197, 15
          %s2202 = smul.addr %s2201, 2
          %s2203 = smul.addr %s2199, 32
          %s2204 = sadd.s32 %s2202, %s2203
          %s2205 = smul.addr %s2204, 4
          %s2206 = scalar_lea.vmem %s3, %s2205
        $region52: #{tpu_custom_call.1} parent=47 // pred_fallthru
          _
        // Predicated region
        $region53: #{tpu_custom_call.1} parent=47 // pred_check
          %p2207 = pneg %p170
        $region54: #{tpu_custom_call.1} parent=47 // pred_check_branch
          %2209 = sbr.rel (%p2207) target = $region56
        $region55: #{tpu_custom_call.1} parent=47 // pred_region
          %s2210 = sand.u32 %s155, 1
          %s2211 = scalar_lea.sflag [#allocation3], %s2210
          %s2212 = sand.u32 %s155, 1
          %s2213 = scalar_lea.vmem [#allocation2], %s2212
          %2214 = dma.done %s2211, 16
        $region56: #{tpu_custom_call.1} parent=47 // pred_fallthru
          _
        // Predicated region
        $region57: #{tpu_custom_call.1} parent=47 // pred_check
          %p2215 = pneg %p198
        $region58: #{tpu_custom_call.1} parent=47 // pred_check_branch
          %2217 = sbr.rel (%p2215) target = $region60
        $region59: #{tpu_custom_call.1} parent=47 // pred_region
          %s2218 = sand.u32 %s183, 1
          %s2219 = scalar_lea.sflag [#allocation5], %s2218
          %s2220 = sand.u32 %s183, 1
          %s2221 = scalar_lea.vmem [#allocation4], %s2220
          %2222 = dma.done %s2219, 16
        $region60: #{tpu_custom_call.1} parent=47 // pred_fallthru
          _
      $region48: #{tpu_custom_call.1} parent=5 // pred_fallthru
        _
    $region6: #{tpu_custom_call.1} parent=1 // loop_footer
      %s22 = sadd.s32 1, %s18
    $region7: #{tpu_custom_call.1} parent=1 // loop_footer_branch
      %17 = sbr.rel target = $region3
    $region8: #{tpu_custom_call.1} parent=1 // loop_exit
      _
    %2223 = vsyncpa [#allocation3], 1
    %s2224 = scalar_lea.sflag [#allocation3], 1
    %2225 = vsyncpa %s2224, 1
    %2226 = vsyncpa [#allocation5], 1
    %s2227 = scalar_lea.sflag [#allocation5], 1
    %2228 = vsyncpa %s2227, 1

</llo_original>
